<compile_context>
chip_gen: v7x
topology: tpu7x:2x2x1
jax: 0.10.0
libtpu: 0.0.40
codegen_flags: <defaults>
</compile_context>

<pallas_src>
import math

import jax
import jax.numpy as jnp
import numpy as np
from jax.experimental import pallas as pl
from jax.experimental.pallas import tpu as pltpu

_LANE = 128


def _round_up(x, m):
    return (x + m - 1) // m * m


def _pad_to(x, shape, dtype=None):
    dtype = dtype or x.dtype
    out = jnp.zeros(shape, dtype)
    return out.at[tuple(slice(0, s) for s in x.shape)].set(x.astype(dtype))


def _sigmoid(x):
    # Exact sigmoid via a single tanh EUP push: cheaper than exp + reciprocal
    # on the serially dependent gate -> cell-state path, and no approx error
    # feeding the recurrent state.
    return 0.5 * jnp.tanh(0.5 * x) + 0.5


def _lstm_decoder_step_kernel(
    enc_ref,    # (TB, T, Hp)  encoder outputs, bf16
    h0_ref,     # (TB, Hp)     decoder hidden state (layer 0), bf16 (MXU operand)
    c0_ref,     # (TB, Hp)     decoder cell state, f32 (VPU only)
    emb_ref,    # (TB, Ep)     embedded input token, bf16
    waenc_ref,  # (Hp, Ap)     attention layer-1 weight^T, encoder half, bf16
    wadec_ref,  # (Hp, Ap)     attention layer-1 weight^T, decoder half, bf16
    wa2_ref,    # (1, Ap)      attention layer-2 weight (no bias), f32
    w2x_ref,    # (Ep, Ep)     fc2 weight^T, embedding half, bf16
    w2c_ref,    # (Hp, Ep)     fc2 weight^T, context half, bf16
    b2_ref,     # (1, Ep)      fc2 bias, f32
    wih_ref,    # (Ep, 4*Hp)   LSTM W_ih^T, gate blocks at k*Hp, bf16
    whh_ref,    # (Hp, 4*Hp)   LSTM W_hh^T, gate blocks at k*Hp, bf16
    bl_ref,     # (1, 4*Hp)    LSTM b_ih + b_hh (folded), f32
    w1_ref,     # (Hp, Op)     fc1 weight^T, bf16
    b1_ref,     # (1, Op)      fc1 bias, f32
    out_ref,    # (TB, Op)     fc1 logits, f32
    hn_ref,     # (TB, Hp)     new hidden state, f32
    cn_ref,     # (TB, Hp)     new cell state, f32
):
    TB, T, Hp = enc_ref.shape
    Ap = waenc_ref.shape[1]

    enc = enc_ref[...]                                   # (TB, T, Hp) bf16
    h0_bf = h0_ref[...]                                  # (TB, Hp) bf16
    c0 = c0_ref[...]                                     # (TB, Hp) f32

    # ---- attention: e[b,t] = w_a2 . tanh(W_enc enc[b,t] + W_dec h0[b]) ------
    # Encoder term: one flattened lane-dense matmul with M = TB*T.
    e_enc = jnp.dot(enc.reshape(TB * T, Hp), waenc_ref[...],
                    preferred_element_type=jnp.float32)           # (TB*T, Ap)
    # Decoder term is t-invariant: compute once, broadcast-add over T.
    e_dec = jnp.dot(h0_bf, wadec_ref[...],
                    preferred_element_type=jnp.float32)           # (TB, Ap)
    e = jnp.tanh(e_enc.reshape(TB, T, Ap) + e_dec[:, None, :])    # (TB, T, Ap)

    # Second attention layer (Ap -> 1) as mul + lane reduce; scores stay in a
    # (TB, T, 1) layout so every later broadcast is from a size-1 dim.
    # TODO(synk): for long encoder sequences switch to a lane-major (TB, T_pad)
    # score layout so the softmax exp/reductions are lane-dense.
    scores = jnp.sum(e * wa2_ref[...], axis=-1, keepdims=True)    # (TB, T, 1)

    # softmax over the time axis (F.softmax(e, dim=1)), numerically stable,
    # exact normalization (no approx reciprocal feeding alpha).
    m = jnp.max(scores, axis=1, keepdims=True)                    # (TB, 1, 1)
    p = jnp.exp(scores - m)
    alpha = p / jnp.sum(p, axis=1, keepdims=True)

    # context vector: sum_t alpha[b,t] * enc[b,t,:]
    ctx = jnp.sum(alpha * enc.astype(jnp.float32), axis=1)        # (TB, Hp) f32

    # ---- fc2 on concat(embedding, context): split matmul avoids the concat --
    u = (jnp.dot(emb_ref[...], w2x_ref[...], preferred_element_type=jnp.float32)
         + jnp.dot(ctx.astype(jnp.bfloat16), w2c_ref[...],
                   preferred_element_type=jnp.float32)
         + b2_ref[...])                                           # (TB, Ep)

    # ---- single LSTM cell step (PyTorch gate order: i, f, g, o) -------------
    gates = (jnp.dot(u.astype(jnp.bfloat16), wih_ref[...],
                     preferred_element_type=jnp.float32)
             + jnp.dot(h0_bf, whh_ref[...], preferred_element_type=jnp.float32)
             + bl_ref[...])                                       # (TB, 4*Hp)
    # Gate blocks were re-packed at k*Hp offsets, so these slices are
    # lane-aligned 128-multiples (no masked partial ops).
    i = _sigmoid(gates[:, 0 * Hp:1 * Hp])
    f = _sigmoid(gates[:, 1 * Hp:2 * Hp])
    g = jnp.tanh(gates[:, 2 * Hp:3 * Hp])
    o = _sigmoid(gates[:, 3 * Hp:4 * Hp])
    c_new = f * c0 + i * g
    h_new = o * jnp.tanh(c_new)

    # ---- fc1 projection of the step output ----------------------------------
    out_ref[...] = (jnp.dot(h_new.astype(jnp.bfloat16), w1_ref[...],
                            preferred_element_type=jnp.float32)
                    + b1_ref[...])
    hn_ref[...] = h_new
    cn_ref[...] = c_new


def init_params(key, vocab_size, embedding_dim, hidden_dim, attention_size,
                output_dim, pad_id):
    E, H, A, O = embedding_dim, hidden_dim, attention_size, output_dim
    ks = jax.random.split(key, 11)

    def u(k, shape, s):
        return jax.random.uniform(k, shape, jnp.float32, -s, s)

    sH = 1.0 / math.sqrt(H)
    s2H = 1.0 / math.sqrt(2 * H)
    sA = 1.0 / math.sqrt(A)
    s2E = 1.0 / math.sqrt(2 * E)

    emb = jax.random.normal(ks[0], (vocab_size, E), jnp.float32) * 0.1
    emb = emb.at[pad_id].set(0.0)          # padding_idx row is zero

    return dict(
        embedding=emb,
        w_att1=u(ks[1], (A, 2 * H), s2H),   # attention Linear(2H, A, bias=False)
        w_att2=u(ks[2], (1, A), sA),        # attention Linear(A, 1, bias=False)
        w_ih=u(ks[3], (4 * H, E), sH),      # LSTM weight_ih_l0
        w_hh=u(ks[4], (4 * H, H), sH),      # LSTM weight_hh_l0
        b_ih=u(ks[5], (4 * H,), sH),
        b_hh=u(ks[6], (4 * H,), sH),
        w_fc1=u(ks[7], (O, H), sH),         # fc1: Linear(H, O)
        b_fc1=u(ks[8], (O,), sH),
        w_fc2=u(ks[9], (E, 2 * E), s2E),    # fc2: Linear(2E, E)  (requires H == E)
        b_fc2=u(ks[10], (E,), s2E),
        # TODO(synk): fc3 (Linear(layers*H, H)) is only used on the layers > 1
        # path, which is not implemented here.
    )


def prepare_params(params, hidden_dim):
    """One-time, per-model kernel-layout prep (hoisted OUT of the decode loop):
    transpose/split weights, pad to 128-lane widths, fold LSTM biases, cast all
    MXU operands to bf16."""
    H = hidden_dim
    E = params["embedding"].shape[1]
    A = params["w_att1"].shape[0]
    O = params["w_fc1"].shape[0]
    if E != H:
        raise ValueError("fc2 split matmul requires embedding_dim == hidden_dim")

    Hp, Ep, Ap, Op = (_round_up(d, _LANE) for d in (H, E, A, O))
    bf16, f32 = jnp.bfloat16, jnp.float32

    wa1 = params["w_att1"]                                 # (A, 2H)
    waenc = _pad_to(wa1[:, :H].T, (Hp, Ap), bf16)
    wadec = _pad_to(wa1[:, H:].T, (Hp, Ap), bf16)
    wa2 = _pad_to(params["w_att2"].reshape(1, A), (1, Ap), f32)

    w2 = params["w_fc2"]                                   # (E, 2E)
    w2x = _pad_to(w2[:, :E].T, (Ep, Ep), bf16)
    w2c = _pad_to(w2[:, E:].T, (Hp, Ep), bf16)
    b2 = _pad_to(params["b_fc2"].reshape(1, E), (1, Ep), f32)

    # LSTM weights: transpose and re-pack each of the 4 gate blocks (PyTorch
    # order i, f, g, o) at lane-aligned k*Hp offsets.
    wih_t = params["w_ih"].T                               # (E, 4H)
    whh_t = params["w_hh"].T                               # (H, 4H)
    bl = (params["b_ih"] + params["b_hh"]).reshape(1, 4 * H)
    wih = jnp.zeros((Ep, 4 * Hp), bf16)
    whh = jnp.zeros((Hp, 4 * Hp), bf16)
    blp = jnp.zeros((1, 4 * Hp), f32)
    for k in range(4):
        wih = wih.at[:E, k * Hp:k * Hp + H].set(
            wih_t[:, k * H:(k + 1) * H].astype(bf16))
        whh = whh.at[:H, k * Hp:k * Hp + H].set(
            whh_t[:, k * H:(k + 1) * H].astype(bf16))
        blp = blp.at[:, k * Hp:k * Hp + H].set(bl[:, k * H:(k + 1) * H])

    w1 = _pad_to(params["w_fc1"].T, (Hp, Op), bf16)
    b1 = _pad_to(params["b_fc1"].reshape(1, O), (1, Op), f32)

    emb_table = _pad_to(params["embedding"],
                        (params["embedding"].shape[0], Ep), bf16)

    return dict(
        dims=(H, E, A, O, Hp, Ep, Ap, Op),
        emb_table=emb_table,
        weights=(waenc, wadec, wa2, w2x, w2c, b2, wih, whh, blp, w1, b1),
    )


def lstm_decoder_forward(x_ids, state, enc_states, prepped, *, block_b=8):
    """Mirrors LstmDecoder.forward for layers == 1 (single decode step)."""
    H, E, A, O, Hp, Ep, Ap, Op = prepped["dims"]
    h0_all, c0_all = state                       # each (layers=1, B, H)
    h0 = h0_all[0]                               # (B, H) == state[0].squeeze(0)
    c0 = c0_all[0]
    B, T, _ = enc_states.shape
    Bp = _round_up(max(B, block_b), block_b)
    nb = Bp // block_b

    bf16, f32 = jnp.bfloat16, jnp.float32
    # Pad batch/features once; padded rows/cols are zero and sliced off below.
    enc_p = _pad_to(enc_states, (Bp, T, Hp), bf16)
    h0_p = _pad_to(h0, (Bp, Hp), bf16)
    c0_p = _pad_to(c0, (Bp, Hp), f32)
    # embedding lookup (gather) stays in plain JAX glue
    emb = jnp.take(prepped["emb_table"], x_ids, axis=0)          # (B, Ep) bf16
    emb_p = _pad_to(emb, (Bp, Ep), bf16)

    (waenc, wadec, wa2, w2x, w2c, b2, wih, whh, blp, w1, b1) = prepped["weights"]

    def batch_spec(shape):
        nd = len(shape)
        return pl.BlockSpec((block_b,) + tuple(shape[1:]),
                            lambda i, _nd=nd: (i,) + (0,) * (_nd - 1))

    def weight_spec(arr):
        nd = arr.ndim
        return pl.BlockSpec(arr.shape, lambda i, _nd=nd: (0,) * _nd)

    in_arrays = (enc_p, h0_p, c0_p, emb_p,
                 waenc, wadec, wa2, w2x, w2c, b2, wih, whh, blp, w1, b1)
    in_specs = ([batch_spec(enc_p.shape), batch_spec(h0_p.shape),
                 batch_spec(c0_p.shape), batch_spec(emb_p.shape)]
                + [weight_spec(w) for w in
                   (waenc, wadec, wa2, w2x, w2c, b2, wih, whh, blp, w1, b1)])

    out_p, hn_p, cn_p = pl.pallas_call(
        _lstm_decoder_step_kernel,
        out_shape=(jax.ShapeDtypeStruct((Bp, Op), f32),
                   jax.ShapeDtypeStruct((Bp, Hp), f32),
                   jax.ShapeDtypeStruct((Bp, Hp), f32)),
        grid=(nb,),
        in_specs=in_specs,
        out_specs=(batch_spec((Bp, Op)), batch_spec((Bp, Hp)),
                   batch_spec((Bp, Hp))),
        compiler_params=pltpu.CompilerParams(
            dimension_semantics=("parallel",),
            vmem_limit_bytes=32 * 1024 * 1024),
    )(*in_arrays)

    out = out_p[:B, :O]
    new_state = (hn_p[:B, :H][None], cn_p[:B, :H][None])   # back to (1, B, H)
    return out, new_state


def lstm_decoder_reference(x_ids, state, enc_states, params):
    """Pure-JAX f32 reference mirroring the PyTorch forward (layers == 1)."""
    h0_all, c0_all = state
    h0, c0 = h0_all[0], c0_all[0]
    B, T, H = enc_states.shape

    # attention_forward
    dec_states = jnp.broadcast_to(h0[:, None, :], enc_states.shape)
    cat = jnp.concatenate([enc_states, dec_states], axis=2)        # (B, T, 2H)
    e = jnp.tanh(cat @ params["w_att1"].T) @ params["w_att2"].T    # (B, T, 1)
    alpha = jax.nn.softmax(e, axis=1)
    ctx = jnp.sum(alpha * enc_states, axis=1)                      # (B, H)

    emb = jnp.take(params["embedding"], x_ids, axis=0)             # (B, E)
    u = jnp.concatenate([emb, ctx], axis=1) @ params["w_fc2"].T + params["b_fc2"]

    gates = (u @ params["w_ih"].T + h0 @ params["w_hh"].T
             + params["b_ih"] + params["b_hh"])
    i = jax.nn.sigmoid(gates[:, :H])
    f = jax.nn.sigmoid(gates[:, H:2 * H])
    g = jnp.tanh(gates[:, 2 * H:3 * H])
    o = jax.nn.sigmoid(gates[:, 3 * H:])
    c_new = f * c0 + i * g
    h_new = o * jnp.tanh(c_new)

    out = h_new @ params["w_fc1"].T + params["b_fc1"]
    return out, (h_new[None], c_new[None])


if __name__ == "__main__":
    vocab_size, embedding_dim, hidden_dim = 50, 32, 32     # decoder requires H == E
    layers, output_dim, attention_size, pad_id = 1, 50, 16, 0
    B, T = 2, 8

    key = jax.random.PRNGKey(0)
    k_params, k_x, k_h, k_c, k_enc = jax.random.split(key, 5)
    params = init_params(k_params, vocab_size, embedding_dim, hidden_dim,
                         attention_size, output_dim, pad_id)
    prepped = prepare_params(params, hidden_dim)           # one-time weight prep

    x_ids = jax.random.randint(k_x, (B,), 0, vocab_size, dtype=jnp.int32)
    enc_states = jax.random.normal(k_enc, (B, T, hidden_dim), jnp.float32)
    state = (jax.random.normal(k_h, (layers, B, hidden_dim), jnp.float32),
             jax.random.normal(k_c, (layers, B, hidden_dim), jnp.float32))

    out, (h_n, c_n) = lstm_decoder_forward(x_ids, state, enc_states, prepped)
    jax.block_until_ready((out, h_n, c_n))

    assert out.shape == (B, output_dim)
    assert h_n.shape == (layers, B, hidden_dim)
    assert c_n.shape == (layers, B, hidden_dim)

    out_r, (hn_r, cn_r) = lstm_decoder_reference(x_ids, state, enc_states, params)
    # bf16 MXU operands -> compare at bf16-appropriate tolerance
    np.testing.assert_allclose(np.asarray(out), np.asarray(out_r), rtol=2e-2, atol=2e-2)
    np.testing.assert_allclose(np.asarray(h_n), np.asarray(hn_r), rtol=2e-2, atol=2e-2)
    np.testing.assert_allclose(np.asarray(c_n), np.asarray(cn_r), rtol=2e-2, atol=2e-2)

    print("KERNEL_OK")
</pallas_src>

<mosaic_0001>
module attributes {stable_mosaic.version = 11 : i64} {
  func.func @_lstm_decoder_step_kernel(%arg0: i32, %arg1: memref<8x8x128xbf16, #tpu.memory_space<vmem>>, %arg2: memref<8x128xbf16, #tpu.memory_space<vmem>>, %arg3: memref<8x128xf32, #tpu.memory_space<vmem>>, %arg4: memref<8x128xbf16, #tpu.memory_space<vmem>>, %arg5: memref<128x128xbf16, #tpu.memory_space<vmem>>, %arg6: memref<128x128xbf16, #tpu.memory_space<vmem>>, %arg7: memref<1x128xf32, #tpu.memory_space<vmem>>, %arg8: memref<128x128xbf16, #tpu.memory_space<vmem>>, %arg9: memref<128x128xbf16, #tpu.memory_space<vmem>>, %arg10: memref<1x128xf32, #tpu.memory_space<vmem>>, %arg11: memref<128x512xbf16, #tpu.memory_space<vmem>>, %arg12: memref<128x512xbf16, #tpu.memory_space<vmem>>, %arg13: memref<1x512xf32, #tpu.memory_space<vmem>>, %arg14: memref<128x128xbf16, #tpu.memory_space<vmem>>, %arg15: memref<1x128xf32, #tpu.memory_space<vmem>>, %arg16: memref<8x128xf32, #tpu.memory_space<vmem>>, %arg17: memref<8x128xf32, #tpu.memory_space<vmem>>, %arg18: memref<8x128xf32, #tpu.memory_space<vmem>>) attributes {dimension_semantics = [#tpu.dimension_semantics<parallel>], iteration_bounds = array<i64: 1>, scalar_prefetch = 0 : i64, scratch_operands = 0 : i64, tpu.core_type = #tpu.core_type<tc>, window_params = [{transform_indices = @transform_0, window_bounds = array<i64: 8, 8, 128>}, {transform_indices = @transform_1, window_bounds = array<i64: 8, 128>}, {transform_indices = @transform_2, window_bounds = array<i64: 8, 128>}, {transform_indices = @transform_3, window_bounds = array<i64: 8, 128>}, {pipeline_mode = #tpu.pipeline_mode<synchronous>, transform_indices = @transform_4, window_bounds = array<i64: 128, 128>}, {pipeline_mode = #tpu.pipeline_mode<synchronous>, transform_indices = @transform_5, window_bounds = array<i64: 128, 128>}, {pipeline_mode = #tpu.pipeline_mode<synchronous>, transform_indices = @transform_6, window_bounds = array<i64: 1, 128>}, {pipeline_mode = #tpu.pipeline_mode<synchronous>, transform_indices = @transform_7, window_bounds = array<i64: 128, 128>}, {pipeline_mode = #tpu.pipeline_mode<synchronous>, transform_indices = @transform_8, window_bounds = array<i64: 128, 128>}, {pipeline_mode = #tpu.pipeline_mode<synchronous>, transform_indices = @transform_9, window_bounds = array<i64: 1, 128>}, {pipeline_mode = #tpu.pipeline_mode<synchronous>, transform_indices = @transform_10, window_bounds = array<i64: 128, 512>}, {pipeline_mode = #tpu.pipeline_mode<synchronous>, transform_indices = @transform_11, window_bounds = array<i64: 128, 512>}, {pipeline_mode = #tpu.pipeline_mode<synchronous>, transform_indices = @transform_12, window_bounds = array<i64: 1, 512>}, {pipeline_mode = #tpu.pipeline_mode<synchronous>, transform_indices = @transform_13, window_bounds = array<i64: 128, 128>}, {pipeline_mode = #tpu.pipeline_mode<synchronous>, transform_indices = @transform_14, window_bounds = array<i64: 1, 128>}, {transform_indices = @transform_15, window_bounds = array<i64: 8, 128>}, {transform_indices = @transform_16, window_bounds = array<i64: 8, 128>}, {transform_indices = @transform_17, window_bounds = array<i64: 8, 128>}]} {
    %c0 = arith.constant 0 : index
    %c0_0 = arith.constant 0 : index
    %c0_1 = arith.constant 0 : index
    %0 = vector.load %arg1[%c0, %c0_0, %c0_1] : memref<8x8x128xbf16, #tpu.memory_space<vmem>>, vector<8x8x128xbf16>
    %c0_2 = arith.constant 0 : index
    %c0_3 = arith.constant 0 : index
    %1 = vector.load %arg2[%c0_2, %c0_3] : memref<8x128xbf16, #tpu.memory_space<vmem>>, vector<8x128xbf16>
    %c0_4 = arith.constant 0 : index
    %c0_5 = arith.constant 0 : index
    %2 = vector.load %arg3[%c0_4, %c0_5] : memref<8x128xf32, #tpu.memory_space<vmem>>, vector<8x128xf32>
    %3 = vector.shape_cast %0 : vector<8x8x128xbf16> to vector<64x128xbf16>
    %c0_6 = arith.constant 0 : index
    %c0_7 = arith.constant 0 : index
    %4 = vector.load %arg5[%c0_6, %c0_7] : memref<128x128xbf16, #tpu.memory_space<vmem>>, vector<128x128xbf16>
    %cst = arith.constant dense<0.000000e+00> : vector<64x128xf32>
    %5 = tpu.matmul %3, %4, %cst {dimension_numbers = #tpu.dot_dimension_numbers<[1], [0], [0], [1], [0, 0, 1, 1], [], []>} : vector<64x128xbf16>, vector<128x128xbf16>, vector<64x128xf32> -> vector<64x128xf32>
    %c0_8 = arith.constant 0 : index
    %c0_9 = arith.constant 0 : index
    %6 = vector.load %arg6[%c0_8, %c0_9] : memref<128x128xbf16, #tpu.memory_space<vmem>>, vector<128x128xbf16>
    %cst_10 = arith.constant dense<0.000000e+00> : vector<8x128xf32>
    %7 = tpu.matmul %1, %6, %cst_10 {dimension_numbers = #tpu.dot_dimension_numbers<[1], [0], [0], [1], [0, 0, 1, 1], [], []>} : vector<8x128xbf16>, vector<128x128xbf16>, vector<8x128xf32> -> vector<8x128xf32>
    %8 = vector.shape_cast %5 : vector<64x128xf32> to vector<8x8x128xf32>
    %9 = vector.shape_cast %7 : vector<8x128xf32> to vector<8x1x128xf32>
    %10 = vector.broadcast %9 : vector<8x1x128xf32> to vector<8x8x128xf32>
    %11 = arith.addf %8, %10 : vector<8x8x128xf32>
    %12 = math.tanh %11 : vector<8x8x128xf32>
    %c0_11 = arith.constant 0 : index
    %c0_12 = arith.constant 0 : index
    %13 = vector.load %arg7[%c0_11, %c0_12] : memref<1x128xf32, #tpu.memory_space<vmem>>, vector<1x128xf32>
    %14 = vector.shape_cast %13 : vector<1x128xf32> to vector<1x1x128xf32>
    %15 = vector.broadcast %14 : vector<1x1x128xf32> to vector<8x8x128xf32>
    %16 = arith.mulf %12, %15 : vector<8x8x128xf32>
    %cst_13 = arith.constant dense<0.000000e+00> : vector<8x8xf32>
    %17 = vector.multi_reduction <add>, %16, %cst_13 [2] : vector<8x8x128xf32> to vector<8x8xf32>
    %18 = vector.shape_cast %17 : vector<8x8xf32> to vector<8x8x1xf32>
    %cst_14 = arith.constant dense<0xFF800000> : vector<8x1xf32>
    %19 = vector.multi_reduction <maximumf>, %18, %cst_14 [1] : vector<8x8x1xf32> to vector<8x1xf32>
    %20 = vector.shape_cast %19 : vector<8x1xf32> to vector<8x1x1xf32>
    %21 = vector.broadcast %20 : vector<8x1x1xf32> to vector<8x8x1xf32>
    %22 = arith.subf %18, %21 : vector<8x8x1xf32>
    %23 = math.exp %22 : vector<8x8x1xf32>
    %cst_15 = arith.constant dense<0.000000e+00> : vector<8x1xf32>
    %24 = vector.multi_reduction <add>, %23, %cst_15 [1] : vector<8x8x1xf32> to vector<8x1xf32>
    %25 = vector.shape_cast %24 : vector<8x1xf32> to vector<8x1x1xf32>
    %26 = vector.broadcast %25 : vector<8x1x1xf32> to vector<8x8x1xf32>
    %27 = arith.divf %23, %26 : vector<8x8x1xf32>
    %28 = arith.extf %0 : vector<8x8x128xbf16> to vector<8x8x128xf32>
    %29 = vector.broadcast %27 : vector<8x8x1xf32> to vector<8x8x128xf32>
    %30 = arith.mulf %29, %28 : vector<8x8x128xf32>
    %cst_16 = arith.constant dense<0.000000e+00> : vector<8x128xf32>
    %31 = vector.multi_reduction <add>, %30, %cst_16 [1] : vector<8x8x128xf32> to vector<8x128xf32>
    %c0_17 = arith.constant 0 : index
    %c0_18 = arith.constant 0 : index
    %32 = vector.load %arg4[%c0_17, %c0_18] : memref<8x128xbf16, #tpu.memory_space<vmem>>, vector<8x128xbf16>
    %c0_19 = arith.constant 0 : index
    %c0_20 = arith.constant 0 : index
    %33 = vector.load %arg8[%c0_19, %c0_20] : memref<128x128xbf16, #tpu.memory_space<vmem>>, vector<128x128xbf16>
    %cst_21 = arith.constant dense<0.000000e+00> : vector<8x128xf32>
    %34 = tpu.matmul %32, %33, %cst_21 {dimension_numbers = #tpu.dot_dimension_numbers<[1], [0], [0], [1], [0, 0, 1, 1], [], []>} : vector<8x128xbf16>, vector<128x128xbf16>, vector<8x128xf32> -> vector<8x128xf32>
    %35 = arith.truncf %31 : vector<8x128xf32> to vector<8x128xbf16>
    %c0_22 = arith.constant 0 : index
    %c0_23 = arith.constant 0 : index
    %36 = vector.load %arg9[%c0_22, %c0_23] : memref<128x128xbf16, #tpu.memory_space<vmem>>, vector<128x128xbf16>
    %cst_24 = arith.constant dense<0.000000e+00> : vector<8x128xf32>
    %37 = tpu.matmul %35, %36, %cst_24 {dimension_numbers = #tpu.dot_dimension_numbers<[1], [0], [0], [1], [0, 0, 1, 1], [], []>} : vector<8x128xbf16>, vector<128x128xbf16>, vector<8x128xf32> -> vector<8x128xf32>
    %38 = arith.addf %34, %37 : vector<8x128xf32>
    %c0_25 = arith.constant 0 : index
    %c0_26 = arith.constant 0 : index
    %39 = vector.load %arg10[%c0_25, %c0_26] : memref<1x128xf32, #tpu.memory_space<vmem>>, vector<1x128xf32>
    %40 = vector.broadcast %39 : vector<1x128xf32> to vector<8x128xf32>
    %41 = arith.addf %38, %40 : vector<8x128xf32>
    %42 = arith.truncf %41 : vector<8x128xf32> to vector<8x128xbf16>
    %c0_27 = arith.constant 0 : index
    %c0_28 = arith.constant 0 : index
    %43 = vector.load %arg11[%c0_27, %c0_28] : memref<128x512xbf16, #tpu.memory_space<vmem>>, vector<128x512xbf16>
    %cst_29 = arith.constant dense<0.000000e+00> : vector<8x512xf32>
    %44 = tpu.matmul %42, %43, %cst_29 {dimension_numbers = #tpu.dot_dimension_numbers<[1], [0], [0], [1], [0, 0, 1, 1], [], []>} : vector<8x128xbf16>, vector<128x512xbf16>, vector<8x512xf32> -> vector<8x512xf32>
    %c0_30 = arith.constant 0 : index
    %c0_31 = arith.constant 0 : index
    %45 = vector.load %arg12[%c0_30, %c0_31] : memref<128x512xbf16, #tpu.memory_space<vmem>>, vector<128x512xbf16>
    %cst_32 = arith.constant dense<0.000000e+00> : vector<8x512xf32>
    %46 = tpu.matmul %1, %45, %cst_32 {dimension_numbers = #tpu.dot_dimension_numbers<[1], [0], [0], [1], [0, 0, 1, 1], [], []>} : vector<8x128xbf16>, vector<128x512xbf16>, vector<8x512xf32> -> vector<8x512xf32>
    %47 = arith.addf %44, %46 : vector<8x512xf32>
    %c0_33 = arith.constant 0 : index
    %c0_34 = arith.constant 0 : index
    %48 = vector.load %arg13[%c0_33, %c0_34] : memref<1x512xf32, #tpu.memory_space<vmem>>, vector<1x512xf32>
    %49 = vector.broadcast %48 : vector<1x512xf32> to vector<8x512xf32>
    %50 = arith.addf %47, %49 : vector<8x512xf32>
    %51 = vector.extract_strided_slice %50 {offsets = [0, 0], sizes = [8, 128], strides = [1, 1]} : vector<8x512xf32> to vector<8x128xf32>
    %cst_35 = arith.constant 5.000000e-01 : f32
    %52 = vector.broadcast %cst_35 : f32 to vector<8x128xf32>
    %53 = arith.mulf %52, %51 : vector<8x128xf32>
    %54 = math.tanh %53 : vector<8x128xf32>
    %cst_36 = arith.constant 5.000000e-01 : f32
    %55 = vector.broadcast %cst_36 : f32 to vector<8x128xf32>
    %56 = arith.mulf %55, %54 : vector<8x128xf32>
    %cst_37 = arith.constant 5.000000e-01 : f32
    %57 = vector.broadcast %cst_37 : f32 to vector<8x128xf32>
    %58 = arith.addf %56, %57 : vector<8x128xf32>
    %59 = vector.extract_strided_slice %50 {offsets = [0, 128], sizes = [8, 128], strides = [1, 1]} : vector<8x512xf32> to vector<8x128xf32>
    %cst_38 = arith.constant 5.000000e-01 : f32
    %60 = vector.broadcast %cst_38 : f32 to vector<8x128xf32>
    %61 = arith.mulf %60, %59 : vector<8x128xf32>
    %62 = math.tanh %61 : vector<8x128xf32>
    %cst_39 = arith.constant 5.000000e-01 : f32
    %63 = vector.broadcast %cst_39 : f32 to vector<8x128xf32>
    %64 = arith.mulf %63, %62 : vector<8x128xf32>
    %cst_40 = arith.constant 5.000000e-01 : f32
    %65 = vector.broadcast %cst_40 : f32 to vector<8x128xf32>
    %66 = arith.addf %64, %65 : vector<8x128xf32>
    %67 = vector.extract_strided_slice %50 {offsets = [0, 256], sizes = [8, 128], strides = [1, 1]} : vector<8x512xf32> to vector<8x128xf32>
    %68 = math.tanh %67 : vector<8x128xf32>
    %69 = vector.extract_strided_slice %50 {offsets = [0, 384], sizes = [8, 128], strides = [1, 1]} : vector<8x512xf32> to vector<8x128xf32>
    %cst_41 = arith.constant 5.000000e-01 : f32
    %70 = vector.broadcast %cst_41 : f32 to vector<8x128xf32>
    %71 = arith.mulf %70, %69 : vector<8x128xf32>
    %72 = math.tanh %71 : vector<8x128xf32>
    %cst_42 = arith.constant 5.000000e-01 : f32
    %73 = vector.broadcast %cst_42 : f32 to vector<8x128xf32>
    %74 = arith.mulf %73, %72 : vector<8x128xf32>
    %cst_43 = arith.constant 5.000000e-01 : f32
    %75 = vector.broadcast %cst_43 : f32 to vector<8x128xf32>
    %76 = arith.addf %74, %75 : vector<8x128xf32>
    %77 = arith.mulf %66, %2 : vector<8x128xf32>
    %78 = arith.mulf %58, %68 : vector<8x128xf32>
    %79 = arith.addf %77, %78 : vector<8x128xf32>
    %80 = math.tanh %79 : vector<8x128xf32>
    %81 = arith.mulf %76, %80 : vector<8x128xf32>
    %82 = arith.truncf %81 : vector<8x128xf32> to vector<8x128xbf16>
    %c0_44 = arith.constant 0 : index
    %c0_45 = arith.constant 0 : index
    %83 = vector.load %arg14[%c0_44, %c0_45] : memref<128x128xbf16, #tpu.memory_space<vmem>>, vector<128x128xbf16>
    %cst_46 = arith.constant dense<0.000000e+00> : vector<8x128xf32>
    %84 = tpu.matmul %82, %83, %cst_46 {dimension_numbers = #tpu.dot_dimension_numbers<[1], [0], [0], [1], [0, 0, 1, 1], [], []>} : vector<8x128xbf16>, vector<128x128xbf16>, vector<8x128xf32> -> vector<8x128xf32>
    %c0_47 = arith.constant 0 : index
    %c0_48 = arith.constant 0 : index
    %85 = vector.load %arg15[%c0_47, %c0_48] : memref<1x128xf32, #tpu.memory_space<vmem>>, vector<1x128xf32>
    %86 = vector.broadcast %85 : vector<1x128xf32> to vector<8x128xf32>
    %87 = arith.addf %84, %86 : vector<8x128xf32>
    %c0_49 = arith.constant 0 : index
    %c0_50 = arith.constant 0 : index
    %88 = vector.load %arg16[%c0_49, %c0_50] : memref<8x128xf32, #tpu.memory_space<vmem>>, vector<8x128xf32>
    tpu.vector_store %arg16[%c0_49, %c0_50], %87 {strides = array<i32>} : memref<8x128xf32, #tpu.memory_space<vmem>>, vector<8x128xf32>,
    %c0_51 = arith.constant 0 : index
    %c0_52 = arith.constant 0 : index
    %89 = vector.load %arg17[%c0_51, %c0_52] : memref<8x128xf32, #tpu.memory_space<vmem>>, vector<8x128xf32>
    tpu.vector_store %arg17[%c0_51, %c0_52], %81 {strides = array<i32>} : memref<8x128xf32, #tpu.memory_space<vmem>>, vector<8x128xf32>,
    %c0_53 = arith.constant 0 : index
    %c0_54 = arith.constant 0 : index
    %90 = vector.load %arg18[%c0_53, %c0_54] : memref<8x128xf32, #tpu.memory_space<vmem>>, vector<8x128xf32>
    tpu.vector_store %arg18[%c0_53, %c0_54], %79 {strides = array<i32>} : memref<8x128xf32, #tpu.memory_space<vmem>>, vector<8x128xf32>,
    return
  }
  func.func @transform_0(%arg0: i32) -> (i32, i32, i32) {
    %c0_i32 = arith.constant 0 : i32
    %c0_i32_0 = arith.constant 0 : i32
    %c0_i32_1 = arith.constant 0 : i32
    return %arg0, %c0_i32, %c0_i32_0 : i32, i32, i32
  }
  func.func @transform_1(%arg0: i32) -> (i32, i32) {
    %c0_i32 = arith.constant 0 : i32
    %c0_i32_0 = arith.constant 0 : i32
    return %arg0, %c0_i32 : i32, i32
  }
  func.func @transform_2(%arg0: i32) -> (i32, i32) {
    %c0_i32 = arith.constant 0 : i32
    %c0_i32_0 = arith.constant 0 : i32
    return %arg0, %c0_i32 : i32, i32
  }
  func.func @transform_3(%arg0: i32) -> (i32, i32) {
    %c0_i32 = arith.constant 0 : i32
    %c0_i32_0 = arith.constant 0 : i32
    return %arg0, %c0_i32 : i32, i32
  }
  func.func @transform_4(%arg0: i32) -> (i32, i32) {
    %c0_i32 = arith.constant 0 : i32
    %c0_i32_0 = arith.constant 0 : i32
    %c0_i32_1 = arith.constant 0 : i32
    return %c0_i32, %c0_i32_0 : i32, i32
  }
  func.func @transform_5(%arg0: i32) -> (i32, i32) {
    %c0_i32 = arith.constant 0 : i32
    %c0_i32_0 = arith.constant 0 : i32
    %c0_i32_1 = arith.constant 0 : i32
    return %c0_i32, %c0_i32_0 : i32, i32
  }
  func.func @transform_6(%arg0: i32) -> (i32, i32) {
    %c0_i32 = arith.constant 0 : i32
    %c0_i32_0 = arith.constant 0 : i32
    %c0_i32_1 = arith.constant 0 : i32
    return %c0_i32, %c0_i32_0 : i32, i32
  }
  func.func @transform_7(%arg0: i32) -> (i32, i32) {
    %c0_i32 = arith.constant 0 : i32
    %c0_i32_0 = arith.constant 0 : i32
    %c0_i32_1 = arith.constant 0 : i32
    return %c0_i32, %c0_i32_0 : i32, i32
  }
  func.func @transform_8(%arg0: i32) -> (i32, i32) {
    %c0_i32 = arith.constant 0 : i32
    %c0_i32_0 = arith.constant 0 : i32
    %c0_i32_1 = arith.constant 0 : i32
    return %c0_i32, %c0_i32_0 : i32, i32
  }
  func.func @transform_9(%arg0: i32) -> (i32, i32) {
    %c0_i32 = arith.constant 0 : i32
    %c0_i32_0 = arith.constant 0 : i32
    %c0_i32_1 = arith.constant 0 : i32
    return %c0_i32, %c0_i32_0 : i32, i32
  }
  func.func @transform_10(%arg0: i32) -> (i32, i32) {
    %c0_i32 = arith.constant 0 : i32
    %c0_i32_0 = arith.constant 0 : i32
    %c0_i32_1 = arith.constant 0 : i32
    return %c0_i32, %c0_i32_0 : i32, i32
  }
  func.func @transform_11(%arg0: i32) -> (i32, i32) {
    %c0_i32 = arith.constant 0 : i32
    %c0_i32_0 = arith.constant 0 : i32
    %c0_i32_1 = arith.constant 0 : i32
    return %c0_i32, %c0_i32_0 : i32, i32
  }
  func.func @transform_12(%arg0: i32) -> (i32, i32) {
    %c0_i32 = arith.constant 0 : i32
    %c0_i32_0 = arith.constant 0 : i32
    %c0_i32_1 = arith.constant 0 : i32
    return %c0_i32, %c0_i32_0 : i32, i32
  }
  func.func @transform_13(%arg0: i32) -> (i32, i32) {
    %c0_i32 = arith.constant 0 : i32
    %c0_i32_0 = arith.constant 0 : i32
    %c0_i32_1 = arith.constant 0 : i32
    return %c0_i32, %c0_i32_0 : i32, i32
  }
  func.func @transform_14(%arg0: i32) -> (i32, i32) {
    %c0_i32 = arith.constant 0 : i32
    %c0_i32_0 = arith.constant 0 : i32
    %c0_i32_1 = arith.constant 0 : i32
    return %c0_i32, %c0_i32_0 : i32, i32
  }
  func.func @transform_15(%arg0: i32) -> (i32, i32) {
    %c0_i32 = arith.constant 0 : i32
    %c0_i32_0 = arith.constant 0 : i32
    return %arg0, %c0_i32 : i32, i32
  }
  func.func @transform_16(%arg0: i32) -> (i32, i32) {
    %c0_i32 = arith.constant 0 : i32
    %c0_i32_0 = arith.constant 0 : i32
    return %arg0, %c0_i32 : i32, i32
  }
  func.func @transform_17(%arg0: i32) -> (i32, i32) {
    %c0_i32 = arith.constant 0 : i32
    %c0_i32_0 = arith.constant 0 : i32
    return %arg0, %c0_i32 : i32, i32
  }
}

</mosaic_0001>

<llo_original>
// kernel: tpu_custom_call.1
$region0: #{tpu_custom_call.1}
  #allocation0 [shape = 'u32[]', space=smem, size = 0x4, offset = 0x4, fixed_abs, tag = 'smem constant byte address 0x4 - core index']
  #allocation1 [shape = 'u32[144,128]{1,0:T(1,128)}', space=vmem, size = 0x12000, scoped, tag = 'internal scratch']
  %s0 = inlined_call_operand.hbm [shape: bf16[8,8,128], index: 0, kind: input, shape index: {}]
  %s1 = inlined_call_operand.hbm [shape: bf16[8,128], index: 1, kind: input, shape index: {}]
  %s2 = inlined_call_operand.hbm [shape: f32[8,128], index: 2, kind: input, shape index: {}]
  %s3 = inlined_call_operand.vmem [shape: bf16[8,128], index: 3, kind: input, shape index: {}]
  %s4 = inlined_call_operand.hbm [shape: bf16[128,128], index: 4, kind: input, shape index: {}]
  %s5 = inlined_call_operand.hbm [shape: bf16[128,128], index: 5, kind: input, shape index: {}]
  %s6 = inlined_call_operand.vmem [shape: f32[1,128], index: 6, kind: input, shape index: {}]
  %s7 = inlined_call_operand.hbm [shape: bf16[128,128], index: 7, kind: input, shape index: {}]
  %s8 = inlined_call_operand.hbm [shape: bf16[128,128], index: 8, kind: input, shape index: {}]
  %s9 = inlined_call_operand.vmem [shape: f32[1,128], index: 9, kind: input, shape index: {}]
  %s10 = inlined_call_operand.hbm [shape: bf16[128,512], index: 10, kind: input, shape index: {}]
  %s11 = inlined_call_operand.hbm [shape: bf16[128,512], index: 11, kind: input, shape index: {}]
  %s12 = inlined_call_operand.vmem [shape: f32[1,512], index: 12, kind: input, shape index: {}]
  %s13 = inlined_call_operand.hbm [shape: bf16[128,128], index: 13, kind: input, shape index: {}]
  %s14 = inlined_call_operand.vmem [shape: f32[1,128], index: 14, kind: input, shape index: {}]
  %s15 = inlined_call_operand.hbm [shape: f32[8,128], index: 15, kind: output, shape index: {0}]
  %s16 = inlined_call_operand.hbm [shape: f32[8,128], index: 16, kind: output, shape index: {1}]
  %s17 = inlined_call_operand.hbm [shape: f32[8,128], index: 17, kind: output, shape index: {2}]
  %18 = xla_tuple %s15, %s16, %s17
  %s19 = sld [smem:[#allocation0]]
  $region126: #{tpu_custom_call.1} parent=0
    _
  %s21 = ssub.s32 1, %s19
  %s22 = scalar_select 0, %s21, %s19
  $region1: #{tpu_custom_call.1} parent=0
    #allocation2 [shape = 'u8[16384]{0}', space=vmem, size = 0x4000, scoped, tag = 'input window, operand 0, single buffered']
    #allocation3 [shape = 's32[1]{0}', space=sflag, size = 0x4, scoped, tag = 'scoped memory for tpu_custom_call.1']
    #allocation4 [shape = 's32[1]{0}', space=sflag, size = 0x4, scoped, tag = 'scoped memory for tpu_custom_call.1']
    #allocation5 [shape = 'u8[2048]{0}', space=vmem, size = 0x800, scoped, tag = 'input window, operand 1, single buffered']
    #allocation6 [shape = 's32[1]{0}', space=sflag, size = 0x4, scoped, tag = 'scoped memory for tpu_custom_call.1']
    #allocation7 [shape = 'u8[4096]{0}', space=vmem, size = 0x1000, scoped, tag = 'input window, operand 2, single buffered']
    #allocation8 [shape = 'u8[32768]{0}', space=vmem, size = 0x8000, scoped, tag = 'input window, operand 4, single buffered']
    #allocation9 [shape = 's32[1]{0}', space=sflag, size = 0x4, scoped, tag = 'scoped memory for tpu_custom_call.1']
    #allocation10 [shape = 'u8[32768]{0}', space=vmem, size = 0x8000, scoped, tag = 'input window, operand 5, single buffered']
    #allocation11 [shape = 'u8[32768]{0}', space=vmem, size = 0x8000, scoped, tag = 'input window, operand 7, single buffered']
    #allocation12 [shape = 's32[1]{0}', space=sflag, size = 0x4, scoped, tag = 'scoped memory for tpu_custom_call.1']
    #allocation13 [shape = 'u8[32768]{0}', space=vmem, size = 0x8000, scoped, tag = 'input window, operand 8, single buffered']
    #allocation14 [shape = 'u8[131072]{0}', space=vmem, size = 0x20000, scoped, tag = 'input window, operand 10, single buffered']
    #allocation15 [shape = 's32[1]{0}', space=sflag, size = 0x4, scoped, tag = 'scoped memory for tpu_custom_call.1']
    #allocation16 [shape = 'u8[131072]{0}', space=vmem, size = 0x20000, scoped, tag = 'input window, operand 11, single buffered']
    #allocation17 [shape = 'u8[32768]{0}', space=vmem, size = 0x8000, scoped, tag = 'input window, operand 13, single buffered']
    #allocation18 [shape = 's32[1]{0}', space=sflag, size = 0x4, scoped, tag = 'scoped memory for tpu_custom_call.1']
    #allocation19 [shape = 'u8[4096]{0}', space=vmem, size = 0x1000, scoped, tag = 'output window, operand 0, single buffered']
    #allocation20 [shape = 'u8[4096]{0}', space=vmem, size = 0x1000, scoped, tag = 'output window, operand 1, single buffered']
    #allocation21 [shape = 's32[1]{0}', space=sflag, size = 0x4, scoped, tag = 'scoped memory for tpu_custom_call.1']
    #allocation22 [shape = 'u8[4096]{0}', space=vmem, size = 0x1000, scoped, tag = 'output window, operand 2, single buffered']
    %23 = vsyncpa [#allocation3], 0
    %24 = vsyncpa [#allocation6], 0
    %25 = vsyncpa [#allocation9], 0
    %26 = vsyncpa [#allocation12], 0
    %27 = vsyncpa [#allocation15], 0
    %28 = vsyncpa [#allocation18], 0
    %29 = vsyncpa [#allocation4], 0
    %30 = vsyncpa [#allocation21], 0
    // Predicated region
    $region2: #{tpu_custom_call.1} parent=1 // pred_check
      _
    $region3: #{tpu_custom_call.1} parent=1 // pred_check_branch
      %32 = sbr.rel (0) target = $region5
    $region4: #{tpu_custom_call.1} parent=1 // pred_region
      %s34 = ssub.s32 512, 512
      %35 = vsyncadd [#allocation3], %s34
      %s36 = sshll.u32 [#allocation2], 4
      %s37 = int_to_ptr.vmem [resolvable:$true] %s36
      %42 = dma.hbm_to_vmem [thread:$0]  %s0, 512, %s37, [#allocation3], 64, 64, 4
    $region5: #{tpu_custom_call.1} parent=1 // pred_fallthru
      _
    // Predicated region
    $region6: #{tpu_custom_call.1} parent=1 // pred_check
      _
    $region7: #{tpu_custom_call.1} parent=1 // pred_check_branch
      %44 = sbr.rel (0) target = $region9
    $region8: #{tpu_custom_call.1} parent=1 // pred_region
      %s46 = ssub.s32 64, 64
      %47 = vsyncadd [#allocation6], %s46
      %s49 = sshll.u32 [#allocation5], 4
      %s50 = int_to_ptr.vmem [resolvable:$true] %s49
      %52 = dma.hbm_to_vmem [thread:$0]  %s1, 64, %s50, [#allocation6]
    $region9: #{tpu_custom_call.1} parent=1 // pred_fallthru
      _
    // Predicated region
    $region10: #{tpu_custom_call.1} parent=1 // pred_check
      _
    $region11: #{tpu_custom_call.1} parent=1 // pred_check_branch
      %54 = sbr.rel (0) target = $region13
    $region12: #{tpu_custom_call.1} parent=1 // pred_region
      %s56 = ssub.s32 128, 128
      %57 = vsyncadd [#allocation6], %s56
      %s59 = sshll.u32 [#allocation7], 4
      %s60 = int_to_ptr.vmem [resolvable:$true] %s59
      %62 = dma.hbm_to_vmem [thread:$0]  %s2, 128, %s60, [#allocation6]
    $region13: #{tpu_custom_call.1} parent=1 // pred_fallthru
      _
    // Predicated region
    $region14: #{tpu_custom_call.1} parent=1 // pred_check
      _
    $region15: #{tpu_custom_call.1} parent=1 // pred_check_branch
      %64 = sbr.rel (0) target = $region17
    $region16: #{tpu_custom_call.1} parent=1 // pred_region
      _
    $region17: #{tpu_custom_call.1} parent=1 // pred_fallthru
      _
    // Predicated region
    $region18: #{tpu_custom_call.1} parent=1 // pred_check
      _
    $region19: #{tpu_custom_call.1} parent=1 // pred_check_branch
      %66 = sbr.rel (0) target = $region21
    $region20: #{tpu_custom_call.1} parent=1 // pred_region
      %s68 = ssub.s32 1024, 1024
      %69 = vsyncadd [#allocation9], %s68
      %s70 = sshll.u32 [#allocation8], 4
      %s71 = int_to_ptr.vmem [resolvable:$true] %s70
      %76 = dma.hbm_to_vmem [thread:$0]  %s4, 1024, %s71, [#allocation9], 64, 64, 4
    $region21: #{tpu_custom_call.1} parent=1 // pred_fallthru
      _
    // Predicated region
    $region22: #{tpu_custom_call.1} parent=1 // pred_check
      _
    $region23: #{tpu_custom_call.1} parent=1 // pred_check_branch
      %78 = sbr.rel (0) target = $region25
    $region24: #{tpu_custom_call.1} parent=1 // pred_region
      %s80 = ssub.s32 1024, 1024
      %81 = vsyncadd [#allocation9], %s80
      %s82 = sshll.u32 [#allocation10], 4
      %s83 = int_to_ptr.vmem [resolvable:$true] %s82
      %88 = dma.hbm_to_vmem [thread:$0]  %s5, 1024, %s83, [#allocation9], 64, 64, 4
    $region25: #{tpu_custom_call.1} parent=1 // pred_fallthru
      _
    // Predicated region
    $region26: #{tpu_custom_call.1} parent=1 // pred_check
      _
    $region27: #{tpu_custom_call.1} parent=1 // pred_check_branch
      %90 = sbr.rel (0) target = $region29
    $region28: #{tpu_custom_call.1} parent=1 // pred_region
      _
    $region29: #{tpu_custom_call.1} parent=1 // pred_fallthru
      _
    // Predicated region
    $region30: #{tpu_custom_call.1} parent=1 // pred_check
      _
    $region31: #{tpu_custom_call.1} parent=1 // pred_check_branch
      %92 = sbr.rel (0) target = $region33
    $region32: #{tpu_custom_call.1} parent=1 // pred_region
      %s94 = ssub.s32 1024, 1024
      %95 = vsyncadd [#allocation12], %s94
      %s96 = sshll.u32 [#allocation11], 4
      %s97 = int_to_ptr.vmem [resolvable:$true] %s96
      %102 = dma.hbm_to_vmem [thread:$0]  %s7, 1024, %s97, [#allocation12], 64, 64, 4
    $region33: #{tpu_custom_call.1} parent=1 // pred_fallthru
      _
    // Predicated region
    $region34: #{tpu_custom_call.1} parent=1 // pred_check
      _
    $region35: #{tpu_custom_call.1} parent=1 // pred_check_branch
      %104 = sbr.rel (0) target = $region37
    $region36: #{tpu_custom_call.1} parent=1 // pred_region
      %s106 = ssub.s32 1024, 1024
      %107 = vsyncadd [#allocation12], %s106
      %s108 = sshll.u32 [#allocation13], 4
      %s109 = int_to_ptr.vmem [resolvable:$true] %s108
      %114 = dma.hbm_to_vmem [thread:$0]  %s8, 1024, %s109, [#allocation12], 64, 64, 4
    $region37: #{tpu_custom_call.1} parent=1 // pred_fallthru
      _
    // Predicated region
    $region38: #{tpu_custom_call.1} parent=1 // pred_check
      _
    $region39: #{tpu_custom_call.1} parent=1 // pred_check_branch
      %116 = sbr.rel (0) target = $region41
    $region40: #{tpu_custom_call.1} parent=1 // pred_region
      _
    $region41: #{tpu_custom_call.1} parent=1 // pred_fallthru
      _
    // Predicated region
    $region42: #{tpu_custom_call.1} parent=1 // pred_check
      _
    $region43: #{tpu_custom_call.1} parent=1 // pred_check_branch
      %118 = sbr.rel (0) target = $region45
    $region44: #{tpu_custom_call.1} parent=1 // pred_region
      %s120 = ssub.s32 4096, 4096
      %121 = vsyncadd [#allocation15], %s120
      %s122 = sshll.u32 [#allocation14], 4
      %s123 = int_to_ptr.vmem [resolvable:$true] %s122
      %128 = dma.hbm_to_vmem [thread:$0]  %s10, 4096, %s123, [#allocation15], 256, 256, 16
    $region45: #{tpu_custom_call.1} parent=1 // pred_fallthru
      _
    // Predicated region
    $region46: #{tpu_custom_call.1} parent=1 // pred_check
      _
    $region47: #{tpu_custom_call.1} parent=1 // pred_check_branch
      %130 = sbr.rel (0) target = $region49
    $region48: #{tpu_custom_call.1} parent=1 // pred_region
      %s132 = ssub.s32 4096, 4096
      %133 = vsyncadd [#allocation15], %s132
      %s134 = sshll.u32 [#allocation16], 4
      %s135 = int_to_ptr.vmem [resolvable:$true] %s134
      %140 = dma.hbm_to_vmem [thread:$0]  %s11, 4096, %s135, [#allocation15], 256, 256, 16
    $region49: #{tpu_custom_call.1} parent=1 // pred_fallthru
      _
    // Predicated region
    $region50: #{tpu_custom_call.1} parent=1 // pred_check
      _
    $region51: #{tpu_custom_call.1} parent=1 // pred_check_branch
      %142 = sbr.rel (0) target = $region53
    $region52: #{tpu_custom_call.1} parent=1 // pred_region
      _
    $region53: #{tpu_custom_call.1} parent=1 // pred_fallthru
      _
    // Predicated region
    $region54: #{tpu_custom_call.1} parent=1 // pred_check
      _
    $region55: #{tpu_custom_call.1} parent=1 // pred_check_branch
      %144 = sbr.rel (0) target = $region57
    $region56: #{tpu_custom_call.1} parent=1 // pred_region
      %s146 = ssub.s32 1024, 1024
      %147 = vsyncadd [#allocation18], %s146
      %s148 = sshll.u32 [#allocation17], 4
      %s149 = int_to_ptr.vmem [resolvable:$true] %s148
      %154 = dma.hbm_to_vmem [thread:$0]  %s13, 1024, %s149, [#allocation18], 64, 64, 4
    $region57: #{tpu_custom_call.1} parent=1 // pred_fallthru
      _
    // Predicated region
    $region58: #{tpu_custom_call.1} parent=1 // pred_check
      _
    $region59: #{tpu_custom_call.1} parent=1 // pred_check_branch
      %156 = sbr.rel (0) target = $region61
    $region60: #{tpu_custom_call.1} parent=1 // pred_region
      _
    $region61: #{tpu_custom_call.1} parent=1 // pred_fallthru
      _
    // Predicated region
    $region62: #{tpu_custom_call.1} parent=1 // pred_check
      _
    $region63: #{tpu_custom_call.1} parent=1 // pred_check_branch
      %158 = sbr.rel (0) target = $region65
    $region64: #{tpu_custom_call.1} parent=1 // pred_region
      %159 = dma.done [#allocation3], 512
    $region65: #{tpu_custom_call.1} parent=1 // pred_fallthru
      _
    // Predicated region
    $region66: #{tpu_custom_call.1} parent=1 // pred_check
      _
    $region67: #{tpu_custom_call.1} parent=1 // pred_check_branch
      %161 = sbr.rel (0) target = $region69
    $region68: #{tpu_custom_call.1} parent=1 // pred_region
      %162 = dma.done [#allocation6], 64
    $region69: #{tpu_custom_call.1} parent=1 // pred_fallthru
      _
    // Predicated region
    $region70: #{tpu_custom_call.1} parent=1 // pred_check
      _
    $region71: #{tpu_custom_call.1} parent=1 // pred_check_branch
      %164 = sbr.rel (0) target = $region73
    $region72: #{tpu_custom_call.1} parent=1 // pred_region
      %165 = dma.done [#allocation6], 128
    $region73: #{tpu_custom_call.1} parent=1 // pred_fallthru
      _
    // Predicated region
    $region74: #{tpu_custom_call.1} parent=1 // pred_check
      _
    $region75: #{tpu_custom_call.1} parent=1 // pred_check_branch
      %167 = sbr.rel (0) target = $region77
    $region76: #{tpu_custom_call.1} parent=1 // pred_region
      %168 = dma.done [#allocation9], 1024
    $region77: #{tpu_custom_call.1} parent=1 // pred_fallthru
      _
    // Predicated region
    $region78: #{tpu_custom_call.1} parent=1 // pred_check
      _
    $region79: #{tpu_custom_call.1} parent=1 // pred_check_branch
      %170 = sbr.rel (0) target = $region81
    $region80: #{tpu_custom_call.1} parent=1 // pred_region
      %171 = dma.done [#allocation9], 1024
    $region81: #{tpu_custom_call.1} parent=1 // pred_fallthru
      _
    // Predicated region
    $region82: #{tpu_custom_call.1} parent=1 // pred_check
      _
    $region83: #{tpu_custom_call.1} parent=1 // pred_check_branch
      %173 = sbr.rel (0) target = $region85
    $region84: #{tpu_custom_call.1} parent=1 // pred_region
      %174 = dma.done [#allocation12], 1024
    $region85: #{tpu_custom_call.1} parent=1 // pred_fallthru
      _
    // Predicated region
    $region86: #{tpu_custom_call.1} parent=1 // pred_check
      _
    $region87: #{tpu_custom_call.1} parent=1 // pred_check_branch
      %176 = sbr.rel (0) target = $region89
    $region88: #{tpu_custom_call.1} parent=1 // pred_region
      %177 = dma.done [#allocation12], 1024
    $region89: #{tpu_custom_call.1} parent=1 // pred_fallthru
      _
    // Predicated region
    $region90: #{tpu_custom_call.1} parent=1 // pred_check
      _
    $region91: #{tpu_custom_call.1} parent=1 // pred_check_branch
      %179 = sbr.rel (0) target = $region93
    $region92: #{tpu_custom_call.1} parent=1 // pred_region
      %180 = dma.done [#allocation15], 4096
    $region93: #{tpu_custom_call.1} parent=1 // pred_fallthru
      _
    // Predicated region
    $region94: #{tpu_custom_call.1} parent=1 // pred_check
      _
    $region95: #{tpu_custom_call.1} parent=1 // pred_check_branch
      %182 = sbr.rel (0) target = $region97
    $region96: #{tpu_custom_call.1} parent=1 // pred_region
      %183 = dma.done [#allocation15], 4096
    $region97: #{tpu_custom_call.1} parent=1 // pred_fallthru
      _
    // Predicated region
    $region98: #{tpu_custom_call.1} parent=1 // pred_check
      _
    $region99: #{tpu_custom_call.1} parent=1 // pred_check_branch
      %185 = sbr.rel (0) target = $region101
    $region100: #{tpu_custom_call.1} parent=1 // pred_region
      %186 = dma.done [#allocation18], 1024
    $region101: #{tpu_custom_call.1} parent=1 // pred_fallthru
      _
    %v188 = vld [vmem:[#allocation2] sm:$0xf]
    %v189 = vld [vmem:[#allocation2 + $0x4] sm:$0xf]
    %v190 = vld [vmem:[#allocation2 + $0x8] sm:$0xf]
    %v191 = vld [vmem:[#allocation2 + $0xc] sm:$0xf]
    %v192 = vld [vmem:[#allocation2 + $0x10] sm:$0xf]
    %v193 = vld [vmem:[#allocation2 + $0x14] sm:$0xf]
    %v194 = vld [vmem:[#allocation2 + $0x18] sm:$0xf]
    %v195 = vld [vmem:[#allocation2 + $0x1c] sm:$0xf]
    %v196 = vld [vmem:[#allocation5] sm:$0xf]
    %v197 = vld [vmem:[#allocation7] sm:$0xff]
    %v198 = vld [vmem:[#allocation8] sm:$0xf]
    %v199 = vld [vmem:[#allocation8 + $0x4] sm:$0xf]
    %v200 = vld [vmem:[#allocation8 + $0x8] sm:$0xf]
    %v201 = vld [vmem:[#allocation8 + $0xc] sm:$0xf]
    %v202 = vld [vmem:[#allocation8 + $0x10] sm:$0xf]
    %v203 = vld [vmem:[#allocation8 + $0x14] sm:$0xf]
    %v204 = vld [vmem:[#allocation8 + $0x18] sm:$0xf]
    %v205 = vld [vmem:[#allocation8 + $0x1c] sm:$0xf]
    %v206 = vld [vmem:[#allocation8 + $0x20] sm:$0xf]
    %v207 = vld [vmem:[#allocation8 + $0x24] sm:$0xf]
    %v208 = vld [vmem:[#allocation8 + $0x28] sm:$0xf]
    %v209 = vld [vmem:[#allocation8 + $0x2c] sm:$0xf]
    %v210 = vld [vmem:[#allocation8 + $0x30] sm:$0xf]
    %v211 = vld [vmem:[#allocation8 + $0x34] sm:$0xf]
    %v212 = vld [vmem:[#allocation8 + $0x38] sm:$0xf]
    %v213 = vld [vmem:[#allocation8 + $0x3c] sm:$0xf]
    %v222 = vunpack.c.l.b16 %v188
    %v223 = vunpack.c.l.b16 %v189
    %v224 = vunpack.c.l.b16 %v190
    %v225 = vunpack.c.l.b16 %v191
    %v226 = vunpack.c.l.b16 %v192
    %v227 = vunpack.c.l.b16 %v193
    %v228 = vunpack.c.l.b16 %v194
    %v229 = vunpack.c.l.b16 %v195
    %v230 = vpack.c.b16 %v223, %v222
    %v231 = vpack.c.b16 %v225, %v224
    %v232 = vpack.c.b16 %v227, %v226
    %v233 = vpack.c.b16 %v229, %v228
    %v254 = vunpack.c.l.b16 %v198
    %v255 = vunpack.c.l.b16 %v199
    %v256 = vunpack.c.l.b16 %v200
    %v257 = vunpack.c.l.b16 %v201
    %v258 = vunpack.c.l.b16 %v202
    %v259 = vunpack.c.l.b16 %v203
    %v260 = vunpack.c.l.b16 %v204
    %v261 = vunpack.c.l.b16 %v205
    %v262 = vunpack.c.l.b16 %v206
    %v263 = vunpack.c.l.b16 %v207
    %v264 = vunpack.c.l.b16 %v208
    %v265 = vunpack.c.l.b16 %v209
    %v266 = vunpack.c.l.b16 %v210
    %v267 = vunpack.c.l.b16 %v211
    %v268 = vunpack.c.l.b16 %v212
    %v269 = vunpack.c.l.b16 %v213
    %v270 = vpack.c.b16 %v255, %v254
    %v271 = vpack.c.b16 %v257, %v256
    %v272 = vpack.c.b16 %v259, %v258
    %v273 = vpack.c.b16 %v261, %v260
    %v274 = vpack.c.b16 %v263, %v262
    %v275 = vpack.c.b16 %v265, %v264
    %v276 = vpack.c.b16 %v267, %v266
    %v277 = vpack.c.b16 %v269, %v268
    %286 = vmatprep.subr.bf16.mxu0 0
    %287 = vmatpush1.bf16.msra.mxu0 %v270
    %288 = vmatprep.subr.bf16.mxu0 0
    %289 = vmatpush1.bf16.msra.mxu0 %v271
    %290 = vmatprep.subr.bf16.mxu0 0
    %291 = vmatpush1.bf16.msra.mxu0 %v272
    %292 = vmatprep.subr.bf16.mxu0 0
    %293 = vmatpush1.bf16.msra.mxu0 %v273
    %294 = vmatprep.subr.bf16.mxu0 0
    %295 = vmatpush1.bf16.msra.mxu0 %v274
    %296 = vmatprep.subr.bf16.mxu0 0
    %297 = vmatpush1.bf16.msra.mxu0 %v275
    %298 = vmatprep.subr.bf16.mxu0 0
    %299 = vmatpush1.bf16.msra.mxu0 %v276
    %300 = vmatprep.subr.bf16.mxu0 0
    %301 = vmatpush1.bf16.msra.mxu0 %v277
    %302 = vmatprep.subr.bf16.mxu0 0
    %303 = vmatpush1.bf16.msra.mxu0 0
    %304 = vmatprep.subr.bf16.mxu0 0
    %305 = vmatpush1.bf16.msra.mxu0 0
    %306 = vmatprep.subr.bf16.mxu0 0
    %307 = vmatpush1.bf16.msra.mxu0 0
    %308 = vmatprep.subr.bf16.mxu0 0
    %309 = vmatpush1.bf16.msra.mxu0 0
    %310 = vmatprep.subr.bf16.mxu0 0
    %311 = vmatpush1.bf16.msra.mxu0 0
    %312 = vmatprep.subr.bf16.mxu0 0
    %313 = vmatpush1.bf16.msra.mxu0 0
    %314 = vmatprep.subr.bf16.mxu0 0
    %315 = vmatpush1.bf16.msra.mxu0 0
    %316 = vmatprep.subr.bf16.mxu0 0
    %317 = vmatpush1.bf16.msra.mxu0 0
    %318 = vmatprep.mubr.bf16.mxu0 0
    %319 = vmatmul.mubr.bf16.gmra.mrb[0].mxu0 %v230
    %v320 = vpop.f32.mrb[0].mxu0
    %v321 = vadd.f32 0.0, %v320
    %v322 = vpop.f32.mrb[0].mxu0
    %v323 = vpop.f32.mrb[0].mxu0
    %v324 = vadd.f32 0.0, %v323
    %v325 = vpop.f32.mrb[0].mxu0
    %326 = vmatprep.mubr.bf16.mxu0 0
    %327 = vmatmul.mubr.bf16.gmra.mrb[0].mxu0 %v231
    %v328 = vpop.f32.mrb[0].mxu0
    %v329 = vadd.f32 0.0, %v328
    %v330 = vpop.f32.mrb[0].mxu0
    %v331 = vpop.f32.mrb[0].mxu0
    %v332 = vadd.f32 0.0, %v331
    %v333 = vpop.f32.mrb[0].mxu0
    %334 = vmatprep.mubr.bf16.mxu0 0
    %335 = vmatmul.mubr.bf16.gmra.mrb[0].mxu0 %v232
    %v336 = vpop.f32.mrb[0].mxu0
    %v337 = vadd.f32 0.0, %v336
    %v338 = vpop.f32.mrb[0].mxu0
    %v339 = vpop.f32.mrb[0].mxu0
    %v340 = vadd.f32 0.0, %v339
    %v341 = vpop.f32.mrb[0].mxu0
    %342 = vmatprep.mubr.bf16.mxu0 0
    %343 = vmatmul.mubr.bf16.gmra.mrb[0].mxu0 %v233
    %v344 = vpop.f32.mrb[0].mxu0
    %v345 = vadd.f32 0.0, %v344
    %v346 = vpop.f32.mrb[0].mxu0
    %v347 = vpop.f32.mrb[0].mxu0
    %v348 = vadd.f32 0.0, %v347
    %v349 = vpop.f32.mrb[0].mxu0
    %350 = vdwg.mxu0
    %v351 = vld [vmem:[#allocation10] sm:$0xf]
    %v352 = vld [vmem:[#allocation10 + $0x4] sm:$0xf]
    %v353 = vld [vmem:[#allocation10 + $0x8] sm:$0xf]
    %v354 = vld [vmem:[#allocation10 + $0xc] sm:$0xf]
    %v355 = vld [vmem:[#allocation10 + $0x10] sm:$0xf]
    %v356 = vld [vmem:[#allocation10 + $0x14] sm:$0xf]
    %v357 = vld [vmem:[#allocation10 + $0x18] sm:$0xf]
    %v358 = vld [vmem:[#allocation10 + $0x1c] sm:$0xf]
    %v359 = vld [vmem:[#allocation10 + $0x20] sm:$0xf]
    %v360 = vld [vmem:[#allocation10 + $0x24] sm:$0xf]
    %v361 = vld [vmem:[#allocation10 + $0x28] sm:$0xf]
    %v362 = vld [vmem:[#allocation10 + $0x2c] sm:$0xf]
    %v363 = vld [vmem:[#allocation10 + $0x30] sm:$0xf]
    %v364 = vld [vmem:[#allocation10 + $0x34] sm:$0xf]
    %v365 = vld [vmem:[#allocation10 + $0x38] sm:$0xf]
    %v366 = vld [vmem:[#allocation10 + $0x3c] sm:$0xf]
    %v383 = vunpack.c.l.b16 %v351
    %v384 = vunpack.c.l.b16 %v352
    %v385 = vunpack.c.l.b16 %v353
    %v386 = vunpack.c.l.b16 %v354
    %v387 = vunpack.c.l.b16 %v355
    %v388 = vunpack.c.l.b16 %v356
    %v389 = vunpack.c.l.b16 %v357
    %v390 = vunpack.c.l.b16 %v358
    %v391 = vunpack.c.l.b16 %v359
    %v392 = vunpack.c.l.b16 %v360
    %v393 = vunpack.c.l.b16 %v361
    %v394 = vunpack.c.l.b16 %v362
    %v395 = vunpack.c.l.b16 %v363
    %v396 = vunpack.c.l.b16 %v364
    %v397 = vunpack.c.l.b16 %v365
    %v398 = vunpack.c.l.b16 %v366
    %v399 = vpack.c.b16 %v384, %v383
    %v400 = vpack.c.b16 %v386, %v385
    %v401 = vpack.c.b16 %v388, %v387
    %v402 = vpack.c.b16 %v390, %v389
    %v403 = vpack.c.b16 %v392, %v391
    %v404 = vpack.c.b16 %v394, %v393
    %v405 = vpack.c.b16 %v396, %v395
    %v406 = vpack.c.b16 %v398, %v397
    %415 = vmatprep.subr.bf16.mxu0 0
    %416 = vmatpush1.bf16.msra.mxu0 %v399
    %417 = vmatprep.subr.bf16.mxu0 0
    %418 = vmatpush1.bf16.msra.mxu0 %v400
    %419 = vmatprep.subr.bf16.mxu0 0
    %420 = vmatpush1.bf16.msra.mxu0 %v401
    %421 = vmatprep.subr.bf16.mxu0 0
    %422 = vmatpush1.bf16.msra.mxu0 %v402
    %423 = vmatprep.subr.bf16.mxu0 0
    %424 = vmatpush1.bf16.msra.mxu0 %v403
    %425 = vmatprep.subr.bf16.mxu0 0
    %426 = vmatpush1.bf16.msra.mxu0 %v404
    %427 = vmatprep.subr.bf16.mxu0 0
    %428 = vmatpush1.bf16.msra.mxu0 %v405
    %429 = vmatprep.subr.bf16.mxu0 0
    %430 = vmatpush1.bf16.msra.mxu0 %v406
    %431 = vmatprep.subr.bf16.mxu0 0
    %432 = vmatpush1.bf16.msra.mxu0 0
    %433 = vmatprep.subr.bf16.mxu0 0
    %434 = vmatpush1.bf16.msra.mxu0 0
    %435 = vmatprep.subr.bf16.mxu0 0
    %436 = vmatpush1.bf16.msra.mxu0 0
    %437 = vmatprep.subr.bf16.mxu0 0
    %438 = vmatpush1.bf16.msra.mxu0 0
    %439 = vmatprep.subr.bf16.mxu0 0
    %440 = vmatpush1.bf16.msra.mxu0 0
    %441 = vmatprep.subr.bf16.mxu0 0
    %442 = vmatpush1.bf16.msra.mxu0 0
    %443 = vmatprep.subr.bf16.mxu0 0
    %444 = vmatpush1.bf16.msra.mxu0 0
    %445 = vmatprep.subr.bf16.mxu0 0
    %446 = vmatpush1.bf16.msra.mxu0 0
    %447 = vmatprep.mubr.bf16.mxu0 0
    %448 = vmatmul.mubr.bf16.gmra.mrb[0].mxu0 %v196
    %v449 = vpop.f32.mrb[0].mxu0
    %v450 = vadd.f32 0.0, %v449
    %v451 = vpop.f32.mrb[0].mxu0
    %v452 = vpop.f32.mrb[0].mxu0
    %v453 = vpop.f32.mrb[0].mxu0
    %454 = vdwg.mxu0
    %v456 = vcombine.high %v450, %v450
    %v458 = vunpack.c.l.s4 1966171168
    %v459 = vunpack.c.0.s8 %v458
    %v460 = vlaneseq
    %v461 = vshrl.u32 %v460, 7
    %v462 = vsub.s32 %v459, %v461
    %v463 = vrot.slane %v450, %v462
    %v465 = vunpack.c.l.s4 1966171168
    %v466 = vunpack.c.0.s8 %v465
    %v467 = vlaneseq
    %v468 = vshrl.u32 %v467, 7
    %v469 = vsub.s32 %v466, %v468
    %v470 = vrot.slane %v456, %v469
    %v471 = vcombine.high %v463, %v463
    %v472 = vcombine.high %v470, %v470
    %v474 = vunpack.c.l.s4 1966171168
    %v475 = vunpack.c.0.s8 %v474
    %v476 = vlaneseq
    %v477 = vshrl.u32 %v476, 7
    %v478 = vsub.s32 %v475, %v477
    %v479 = vrot.slane %v463, %v478
    %v481 = vunpack.c.l.s4 1966171168
    %v482 = vunpack.c.0.s8 %v481
    %v483 = vlaneseq
    %v484 = vshrl.u32 %v483, 7
    %v485 = vsub.s32 %v482, %v484
    %v486 = vrot.slane %v470, %v485
    %v488 = vunpack.c.l.s4 1966171168
    %v489 = vunpack.c.0.s8 %v488
    %v490 = vlaneseq
    %v491 = vshrl.u32 %v490, 7
    %v492 = vsub.s32 %v489, %v491
    %v493 = vrot.slane %v471, %v492
    %v495 = vunpack.c.l.s4 1966171168
    %v496 = vunpack.c.0.s8 %v495
    %v497 = vlaneseq
    %v498 = vshrl.u32 %v497, 7
    %v499 = vsub.s32 %v496, %v498
    %v500 = vrot.slane %v472, %v499
    %v501 = vcombine.high %v479, %v479
    %v502 = vcombine.high %v486, %v486
    %v503 = vcombine.high %v493, %v493
    %v504 = vcombine.high %v500, %v500
    %v505 = vlaneseq
    %v506 = vshrl.u32 %v505, 7
    %v507 = vsub.s32 0, %v506
    %v508 = vrot.slane %v479, %v507
    %v509 = vlaneseq
    %v510 = vshrl.u32 %v509, 7
    %v511 = vsub.s32 0, %v510
    %v512 = vrot.slane %v493, %v511
    %v513 = vlaneseq
    %v514 = vshrl.u32 %v513, 7
    %v515 = vsub.s32 0, %v514
    %v516 = vrot.slane %v501, %v515
    %v517 = vlaneseq
    %v518 = vshrl.u32 %v517, 7
    %v519 = vsub.s32 0, %v518
    %v520 = vrot.slane %v503, %v519
    %v521 = vlaneseq
    %v522 = vshrl.u32 %v521, 7
    %v523 = vsub.s32 0, %v522
    %v524 = vrot.slane %v486, %v523
    %v525 = vlaneseq
    %v526 = vshrl.u32 %v525, 7
    %v527 = vsub.s32 0, %v526
    %v528 = vrot.slane %v500, %v527
    %v529 = vlaneseq
    %v530 = vshrl.u32 %v529, 7
    %v531 = vsub.s32 0, %v530
    %v532 = vrot.slane %v502, %v531
    %v533 = vlaneseq
    %v534 = vshrl.u32 %v533, 7
    %v535 = vsub.s32 0, %v534
    %v536 = vrot.slane %v504, %v535
    %v545 = vadd.f32 %v321, %v508
    %v546 = vadd.f32 %v324, %v512
    %v547 = vadd.f32 %v329, %v516
    %v548 = vadd.f32 %v332, %v520
    %v549 = vadd.f32 %v337, %v524
    %v550 = vadd.f32 %v340, %v528
    %v551 = vadd.f32 %v345, %v532
    %v552 = vadd.f32 %v348, %v536
    %v553 = vtanh.pop %v545
    %v554 = vtanh.pop %v546
    %v555 = vtanh.pop %v547
    %v556 = vtanh.pop %v548
    %v557 = vtanh.pop %v549
    %v558 = vtanh.pop %v550
    %v559 = vtanh.pop %v551
    %v560 = vtanh.pop %v552
    %v561 = vld [vmem:[%s6] sm:$0x1]
    %v563 = vlaneseq
    %v564 = vshrl.u32 %v563, 7
    %v565 = vsub.s32 0, %v564
    %v566 = vrot.slane %v561, %v565
    %v568 = vmul.f32 %v553, %v566
    %v569 = vmul.f32 %v554, %v566
    %v570 = vmul.f32 %v555, %v566
    %v571 = vmul.f32 %v556, %v566
    %v572 = vmul.f32 %v557, %v566
    %v573 = vmul.f32 %v558, %v566
    %v574 = vmul.f32 %v559, %v566
    %v575 = vmul.f32 %v560, %v566
    %576 = vadd.xlane.f32.xlu0 %v568
    %v577 = vpop.xlane.xlu0 %576
    %578 = vadd.xlane.f32.xlu0 %v569
    %v579 = vpop.xlane.xlu0 %578
    %580 = vadd.xlane.f32.xlu0 %v570
    %v581 = vpop.xlane.xlu0 %580
    %582 = vadd.xlane.f32.xlu0 %v571
    %v583 = vpop.xlane.xlu0 %582
    %584 = vadd.xlane.f32.xlu0 %v572
    %v585 = vpop.xlane.xlu0 %584
    %586 = vadd.xlane.f32.xlu0 %v573
    %v587 = vpop.xlane.xlu0 %586
    %588 = vadd.xlane.f32.xlu0 %v574
    %v589 = vpop.xlane.xlu0 %588
    %590 = vadd.xlane.f32.xlu0 %v575
    %v591 = vpop.xlane.xlu0 %590
    %v592 = vrot.slane %v577, 4
    %v593 = vmax.f32 %v577, %v592
    %v594 = vrot.slane %v593, 2
    %v595 = vmax.f32 %v593, %v594
    %v596 = vrot.slane %v595, 1
    %v597 = vmax.f32 %v595, %v596
    %v598 = vrot.slane %v579, 4
    %v599 = vmax.f32 %v579, %v598
    %v600 = vrot.slane %v599, 2
    %v601 = vmax.f32 %v599, %v600
    %v602 = vrot.slane %v601, 1
    %v603 = vmax.f32 %v601, %v602
    %v604 = vrot.slane %v581, 4
    %v605 = vmax.f32 %v581, %v604
    %v606 = vrot.slane %v605, 2
    %v607 = vmax.f32 %v605, %v606
    %v608 = vrot.slane %v607, 1
    %v609 = vmax.f32 %v607, %v608
    %v610 = vrot.slane %v583, 4
    %v611 = vmax.f32 %v583, %v610
    %v612 = vrot.slane %v611, 2
    %v613 = vmax.f32 %v611, %v612
    %v614 = vrot.slane %v613, 1
    %v615 = vmax.f32 %v613, %v614
    %v616 = vrot.slane %v585, 4
    %v617 = vmax.f32 %v585, %v616
    %v618 = vrot.slane %v617, 2
    %v619 = vmax.f32 %v617, %v618
    %v620 = vrot.slane %v619, 1
    %v621 = vmax.f32 %v619, %v620
    %v622 = vrot.slane %v587, 4
    %v623 = vmax.f32 %v587, %v622
    %v624 = vrot.slane %v623, 2
    %v625 = vmax.f32 %v623, %v624
    %v626 = vrot.slane %v625, 1
    %v627 = vmax.f32 %v625, %v626
    %v628 = vrot.slane %v589, 4
    %v629 = vmax.f32 %v589, %v628
    %v630 = vrot.slane %v629, 2
    %v631 = vmax.f32 %v629, %v630
    %v632 = vrot.slane %v631, 1
    %v633 = vmax.f32 %v631, %v632
    %v634 = vrot.slane %v591, 4
    %v635 = vmax.f32 %v591, %v634
    %v636 = vrot.slane %v635, 2
    %v637 = vmax.f32 %v635, %v636
    %v638 = vrot.slane %v637, 1
    %v639 = vmax.f32 %v637, %v638
    %v640 = vsub.f32 %v577, %v597
    %v641 = vsub.f32 %v579, %v603
    %v642 = vsub.f32 %v581, %v609
    %v643 = vsub.f32 %v583, %v615
    %v644 = vsub.f32 %v585, %v621
    %v645 = vsub.f32 %v587, %v627
    %v646 = vsub.f32 %v589, %v633
    %v647 = vsub.f32 %v591, %v639
    %v648 = vmul.f32 %v640, 1.442695
    %v649 = vpow.pop %v648
    %v650 = vmul.f32 %v641, 1.442695
    %v651 = vpow.pop %v650
    %v652 = vmul.f32 %v642, 1.442695
    %v653 = vpow.pop %v652
    %v654 = vmul.f32 %v643, 1.442695
    %v655 = vpow.pop %v654
    %v656 = vmul.f32 %v644, 1.442695
    %v657 = vpow.pop %v656
    %v658 = vmul.f32 %v645, 1.442695
    %v659 = vpow.pop %v658
    %v660 = vmul.f32 %v646, 1.442695
    %v661 = vpow.pop %v660
    %v662 = vmul.f32 %v647, 1.442695
    %v663 = vpow.pop %v662
    %v664 = vrot.slane %v649, 4
    %v665 = vadd.f32 %v649, %v664
    %v666 = vrot.slane %v665, 2
    %v667 = vadd.f32 %v665, %v666
    %v668 = vrot.slane %v667, 1
    %v669 = vadd.f32 %v667, %v668
    %v670 = vrot.slane %v651, 4
    %v671 = vadd.f32 %v651, %v670
    %v672 = vrot.slane %v671, 2
    %v673 = vadd.f32 %v671, %v672
    %v674 = vrot.slane %v673, 1
    %v675 = vadd.f32 %v673, %v674
    %v676 = vrot.slane %v653, 4
    %v677 = vadd.f32 %v653, %v676
    %v678 = vrot.slane %v677, 2
    %v679 = vadd.f32 %v677, %v678
    %v680 = vrot.slane %v679, 1
    %v681 = vadd.f32 %v679, %v680
    %v682 = vrot.slane %v655, 4
    %v683 = vadd.f32 %v655, %v682
    %v684 = vrot.slane %v683, 2
    %v685 = vadd.f32 %v683, %v684
    %v686 = vrot.slane %v685, 1
    %v687 = vadd.f32 %v685, %v686
    %v688 = vrot.slane %v657, 4
    %v689 = vadd.f32 %v657, %v688
    %v690 = vrot.slane %v689, 2
    %v691 = vadd.f32 %v689, %v690
    %v692 = vrot.slane %v691, 1
    %v693 = vadd.f32 %v691, %v692
    %v694 = vrot.slane %v659, 4
    %v695 = vadd.f32 %v659, %v694
    %v696 = vrot.slane %v695, 2
    %v697 = vadd.f32 %v695, %v696
    %v698 = vrot.slane %v697, 1
    %v699 = vadd.f32 %v697, %v698
    %v700 = vrot.slane %v661, 4
    %v701 = vadd.f32 %v661, %v700
    %v702 = vrot.slane %v701, 2
    %v703 = vadd.f32 %v701, %v702
    %v704 = vrot.slane %v703, 1
    %v705 = vadd.f32 %v703, %v704
    %v706 = vrot.slane %v663, 4
    %v707 = vadd.f32 %v663, %v706
    %v708 = vrot.slane %v707, 2
    %v709 = vadd.f32 %v707, %v708
    %v710 = vrot.slane %v709, 1
    %v711 = vadd.f32 %v709, %v710
    %v712 = vrcp.pop %v669
    %v713 = vmul.f32 %v649, %v712
    %v714 = vrcp.pop %v675
    %v715 = vmul.f32 %v651, %v714
    %v716 = vrcp.pop %v681
    %v717 = vmul.f32 %v653, %v716
    %v718 = vrcp.pop %v687
    %v719 = vmul.f32 %v655, %v718
    %v720 = vrcp.pop %v693
    %v721 = vmul.f32 %v657, %v720
    %v722 = vrcp.pop %v699
    %v723 = vmul.f32 %v659, %v722
    %v724 = vrcp.pop %v705
    %v725 = vmul.f32 %v661, %v724
    %v726 = vrcp.pop %v711
    %v727 = vmul.f32 %v663, %v726
    %v728 = vunpack.c.l.bf16 %v188
    %v729 = vunpack.c.l.bf16 %v189
    %v730 = vunpack.c.l.bf16 %v190
    %v731 = vunpack.c.l.bf16 %v191
    %v732 = vunpack.c.l.bf16 %v192
    %v733 = vunpack.c.l.bf16 %v193
    %v734 = vunpack.c.l.bf16 %v194
    %v735 = vunpack.c.l.bf16 %v195
    %v736 = vmul.f32 %v713, %v728
    %v737 = vmul.f32 %v715, %v729
    %v738 = vmul.f32 %v717, %v730
    %v739 = vmul.f32 %v719, %v731
    %v740 = vmul.f32 %v721, %v732
    %v741 = vmul.f32 %v723, %v733
    %v742 = vmul.f32 %v725, %v734
    %v743 = vmul.f32 %v727, %v735
    %v744 = vrot.slane %v736, 4
    %v745 = vadd.f32 %v736, %v744
    %v746 = vrot.slane %v745, 2
    %v747 = vadd.f32 %v745, %v746
    %v748 = vrot.slane %v747, 1
    %v749 = vadd.f32 %v747, %v748
    %v750 = vrot.slane %v737, 4
    %v751 = vadd.f32 %v737, %v750
    %v752 = vrot.slane %v751, 2
    %v753 = vadd.f32 %v751, %v752
    %v754 = vrot.slane %v753, 1
    %v755 = vadd.f32 %v753, %v754
    %v756 = vrot.slane %v738, 4
    %v757 = vadd.f32 %v738, %v756
    %v758 = vrot.slane %v757, 2
    %v759 = vadd.f32 %v757, %v758
    %v760 = vrot.slane %v759, 1
    %v761 = vadd.f32 %v759, %v760
    %v762 = vrot.slane %v739, 4
    %v763 = vadd.f32 %v739, %v762
    %v764 = vrot.slane %v763, 2
    %v765 = vadd.f32 %v763, %v764
    %v766 = vrot.slane %v765, 1
    %v767 = vadd.f32 %v765, %v766
    %v768 = vrot.slane %v740, 4
    %v769 = vadd.f32 %v740, %v768
    %v770 = vrot.slane %v769, 2
    %v771 = vadd.f32 %v769, %v770
    %v772 = vrot.slane %v771, 1
    %v773 = vadd.f32 %v771, %v772
    %v774 = vrot.slane %v741, 4
    %v775 = vadd.f32 %v741, %v774
    %v776 = vrot.slane %v775, 2
    %v777 = vadd.f32 %v775, %v776
    %v778 = vrot.slane %v777, 1
    %v779 = vadd.f32 %v777, %v778
    %v780 = vrot.slane %v742, 4
    %v781 = vadd.f32 %v742, %v780
    %v782 = vrot.slane %v781, 2
    %v783 = vadd.f32 %v781, %v782
    %v784 = vrot.slane %v783, 1
    %v785 = vadd.f32 %v783, %v784
    %v786 = vrot.slane %v743, 4
    %v787 = vadd.f32 %v743, %v786
    %v788 = vrot.slane %v787, 2
    %v789 = vadd.f32 %v787, %v788
    %v790 = vrot.slane %v789, 1
    %v791 = vadd.f32 %v789, %v790
    %v792 = vld [vmem:[%s3] sm:$0xf]
    %v793 = vld [vmem:[#allocation11] sm:$0xf]
    %v794 = vld [vmem:[#allocation11 + $0x4] sm:$0xf]
    %v795 = vld [vmem:[#allocation11 + $0x8] sm:$0xf]
    %v796 = vld [vmem:[#allocation11 + $0xc] sm:$0xf]
    %v797 = vld [vmem:[#allocation11 + $0x10] sm:$0xf]
    %v798 = vld [vmem:[#allocation11 + $0x14] sm:$0xf]
    %v799 = vld [vmem:[#allocation11 + $0x18] sm:$0xf]
    %v800 = vld [vmem:[#allocation11 + $0x1c] sm:$0xf]
    %v801 = vld [vmem:[#allocation11 + $0x20] sm:$0xf]
    %v802 = vld [vmem:[#allocation11 + $0x24] sm:$0xf]
    %v803 = vld [vmem:[#allocation11 + $0x28] sm:$0xf]
    %v804 = vld [vmem:[#allocation11 + $0x2c] sm:$0xf]
    %v805 = vld [vmem:[#allocation11 + $0x30] sm:$0xf]
    %v806 = vld [vmem:[#allocation11 + $0x34] sm:$0xf]
    %v807 = vld [vmem:[#allocation11 + $0x38] sm:$0xf]
    %v808 = vld [vmem:[#allocation11 + $0x3c] sm:$0xf]
    %v809 = vpack.c.bf16 %v749, %v749
    %v810 = vpack.c.bf16 %v755, %v755
    %v811 = vpack.c.bf16 %v761, %v761
    %v812 = vpack.c.bf16 %v767, %v767
    %v813 = vpack.c.bf16 %v773, %v773
    %v814 = vpack.c.bf16 %v779, %v779
    %v815 = vpack.c.bf16 %v785, %v785
    %v816 = vpack.c.bf16 %v791, %v791
    %v817 = vld [vmem:[#allocation13] sm:$0xf]
    %v818 = vld [vmem:[#allocation13 + $0x4] sm:$0xf]
    %v819 = vld [vmem:[#allocation13 + $0x8] sm:$0xf]
    %v820 = vld [vmem:[#allocation13 + $0xc] sm:$0xf]
    %v821 = vld [vmem:[#allocation13 + $0x10] sm:$0xf]
    %v822 = vld [vmem:[#allocation13 + $0x14] sm:$0xf]
    %v823 = vld [vmem:[#allocation13 + $0x18] sm:$0xf]
    %v824 = vld [vmem:[#allocation13 + $0x1c] sm:$0xf]
    %v825 = vld [vmem:[#allocation13 + $0x20] sm:$0xf]
    %v826 = vld [vmem:[#allocation13 + $0x24] sm:$0xf]
    %v827 = vld [vmem:[#allocation13 + $0x28] sm:$0xf]
    %v828 = vld [vmem:[#allocation13 + $0x2c] sm:$0xf]
    %v829 = vld [vmem:[#allocation13 + $0x30] sm:$0xf]
    %v830 = vld [vmem:[#allocation13 + $0x34] sm:$0xf]
    %v831 = vld [vmem:[#allocation13 + $0x38] sm:$0xf]
    %v832 = vld [vmem:[#allocation13 + $0x3c] sm:$0xf]
    %v841 = vunpack.c.l.b16 %v809
    %v842 = vunpack.c.l.b16 %v810
    %v843 = vunpack.c.l.b16 %v811
    %v844 = vunpack.c.l.b16 %v812
    %v845 = vunpack.c.l.b16 %v813
    %v846 = vunpack.c.l.b16 %v814
    %v847 = vunpack.c.l.b16 %v815
    %v848 = vunpack.c.l.b16 %v816
    %vm849 = vcmask 1041409
    %v850 = vsel %vm849, %v842, %v841
    %vm851 = vcmask 1042434
    %v852 = vsel %vm851, %v843, %v850
    %vm853 = vcmask 1043459
    %v854 = vsel %vm853, %v844, %v852
    %vm855 = vcmask 1044484
    %v856 = vsel %vm855, %v845, %v854
    %vm857 = vcmask 1045509
    %v858 = vsel %vm857, %v846, %v856
    %vm859 = vcmask 1046534
    %v860 = vsel %vm859, %v847, %v858
    %vm861 = vcmask 1047559
    %v862 = vsel %vm861, %v848, %v860
    %v863 = vpack.c.b16 %v862, %v862
    %v881 = vunpack.c.l.b16 %v817
    %v882 = vunpack.c.l.b16 %v818
    %v883 = vunpack.c.l.b16 %v819
    %v884 = vunpack.c.l.b16 %v820
    %v885 = vunpack.c.l.b16 %v821
    %v886 = vunpack.c.l.b16 %v822
    %v887 = vunpack.c.l.b16 %v823
    %v888 = vunpack.c.l.b16 %v824
    %v889 = vunpack.c.l.b16 %v825
    %v890 = vunpack.c.l.b16 %v826
    %v891 = vunpack.c.l.b16 %v827
    %v892 = vunpack.c.l.b16 %v828
    %v893 = vunpack.c.l.b16 %v829
    %v894 = vunpack.c.l.b16 %v830
    %v895 = vunpack.c.l.b16 %v831
    %v896 = vunpack.c.l.b16 %v832
    %v897 = vpack.c.b16 %v882, %v881
    %v898 = vpack.c.b16 %v884, %v883
    %v899 = vpack.c.b16 %v886, %v885
    %v900 = vpack.c.b16 %v888, %v887
    %v901 = vpack.c.b16 %v890, %v889
    %v902 = vpack.c.b16 %v892, %v891
    %v903 = vpack.c.b16 %v894, %v893
    %v904 = vpack.c.b16 %v896, %v895
    %913 = vmatprep.subr.bf16.mxu0 0
    %914 = vmatpush1.bf16.msra.mxu0 %v897
    %915 = vmatprep.subr.bf16.mxu0 0
    %916 = vmatpush1.bf16.msra.mxu0 %v898
    %917 = vmatprep.subr.bf16.mxu0 0
    %918 = vmatpush1.bf16.msra.mxu0 %v899
    %919 = vmatprep.subr.bf16.mxu0 0
    %920 = vmatpush1.bf16.msra.mxu0 %v900
    %921 = vmatprep.subr.bf16.mxu0 0
    %922 = vmatpush1.bf16.msra.mxu0 %v901
    %923 = vmatprep.subr.bf16.mxu0 0
    %924 = vmatpush1.bf16.msra.mxu0 %v902
    %925 = vmatprep.subr.bf16.mxu0 0
    %926 = vmatpush1.bf16.msra.mxu0 %v903
    %927 = vmatprep.subr.bf16.mxu0 0
    %928 = vmatpush1.bf16.msra.mxu0 %v904
    %929 = vmatprep.subr.bf16.mxu0 0
    %930 = vmatpush1.bf16.msra.mxu0 0
    %931 = vmatprep.subr.bf16.mxu0 0
    %932 = vmatpush1.bf16.msra.mxu0 0
    %933 = vmatprep.subr.bf16.mxu0 0
    %934 = vmatpush1.bf16.msra.mxu0 0
    %935 = vmatprep.subr.bf16.mxu0 0
    %936 = vmatpush1.bf16.msra.mxu0 0
    %937 = vmatprep.subr.bf16.mxu0 0
    %938 = vmatpush1.bf16.msra.mxu0 0
    %939 = vmatprep.subr.bf16.mxu0 0
    %940 = vmatpush1.bf16.msra.mxu0 0
    %941 = vmatprep.subr.bf16.mxu0 0
    %942 = vmatpush1.bf16.msra.mxu0 0
    %943 = vmatprep.subr.bf16.mxu0 0
    %944 = vmatpush1.bf16.msra.mxu0 0
    %945 = vmatprep.mubr.bf16.mxu0 0
    %946 = vmatmul.mubr.bf16.gmra.mrb[0].mxu0 %v863
    %v947 = vpop.f32.mrb[0].mxu0
    %v948 = vadd.f32 0.0, %v947
    %v949 = vpop.f32.mrb[0].mxu0
    %v950 = vpop.f32.mrb[0].mxu0
    %v951 = vpop.f32.mrb[0].mxu0
    %952 = vdwg.mxu0
    %v969 = vunpack.c.l.b16 %v793
    %v970 = vunpack.c.l.b16 %v794
    %v971 = vunpack.c.l.b16 %v795
    %v972 = vunpack.c.l.b16 %v796
    %v973 = vunpack.c.l.b16 %v797
    %v974 = vunpack.c.l.b16 %v798
    %v975 = vunpack.c.l.b16 %v799
    %v976 = vunpack.c.l.b16 %v800
    %v977 = vunpack.c.l.b16 %v801
    %v978 = vunpack.c.l.b16 %v802
    %v979 = vunpack.c.l.b16 %v803
    %v980 = vunpack.c.l.b16 %v804
    %v981 = vunpack.c.l.b16 %v805
    %v982 = vunpack.c.l.b16 %v806
    %v983 = vunpack.c.l.b16 %v807
    %v984 = vunpack.c.l.b16 %v808
    %v985 = vpack.c.b16 %v970, %v969
    %v986 = vpack.c.b16 %v972, %v971
    %v987 = vpack.c.b16 %v974, %v973
    %v988 = vpack.c.b16 %v976, %v975
    %v989 = vpack.c.b16 %v978, %v977
    %v990 = vpack.c.b16 %v980, %v979
    %v991 = vpack.c.b16 %v982, %v981
    %v992 = vpack.c.b16 %v984, %v983
    %1001 = vmatprep.subr.bf16.mxu0 0
    %1002 = vmatpush1.bf16.msra.mxu0 %v985
    %1003 = vmatprep.subr.bf16.mxu0 0
    %1004 = vmatpush1.bf16.msra.mxu0 %v986
    %1005 = vmatprep.subr.bf16.mxu0 0
    %1006 = vmatpush1.bf16.msra.mxu0 %v987
    %1007 = vmatprep.subr.bf16.mxu0 0
    %1008 = vmatpush1.bf16.msra.mxu0 %v988
    %1009 = vmatprep.subr.bf16.mxu0 0
    %1010 = vmatpush1.bf16.msra.mxu0 %v989
    %1011 = vmatprep.subr.bf16.mxu0 0
    %1012 = vmatpush1.bf16.msra.mxu0 %v990
    %1013 = vmatprep.subr.bf16.mxu0 0
    %1014 = vmatpush1.bf16.msra.mxu0 %v991
    %1015 = vmatprep.subr.bf16.mxu0 0
    %1016 = vmatpush1.bf16.msra.mxu0 %v992
    %1017 = vmatprep.subr.bf16.mxu0 0
    %1018 = vmatpush1.bf16.msra.mxu0 0
    %1019 = vmatprep.subr.bf16.mxu0 0
    %1020 = vmatpush1.bf16.msra.mxu0 0
    %1021 = vmatprep.subr.bf16.mxu0 0
    %1022 = vmatpush1.bf16.msra.mxu0 0
    %1023 = vmatprep.subr.bf16.mxu0 0
    %1024 = vmatpush1.bf16.msra.mxu0 0
    %1025 = vmatprep.subr.bf16.mxu0 0
    %1026 = vmatpush1.bf16.msra.mxu0 0
    %1027 = vmatprep.subr.bf16.mxu0 0
    %1028 = vmatpush1.bf16.msra.mxu0 0
    %1029 = vmatprep.subr.bf16.mxu0 0
    %1030 = vmatpush1.bf16.msra.mxu0 0
    %1031 = vmatprep.subr.bf16.mxu0 0
    %1032 = vmatpush1.bf16.msra.mxu0 0
    %1033 = vmatprep.mubr.bf16.mxu0 0
    %1034 = vmatmul.mubr.bf16.gmra.mrb[0].mxu0 %v792
    %v1035 = vpop.f32.mrb[0].mxu0
    %v1036 = vadd.f32 %v948, %v1035
    %v1037 = vpop.f32.mrb[0].mxu0
    %v1038 = vpop.f32.mrb[0].mxu0
    %v1039 = vpop.f32.mrb[0].mxu0
    %1040 = vdwg.mxu0
    %v1041 = vld [vmem:[%s9] sm:$0x1]
    %v1043 = vlaneseq
    %v1044 = vshrl.u32 %v1043, 7
    %v1045 = vsub.s32 0, %v1044
    %v1046 = vrot.slane %v1041, %v1045
    %v1048 = vadd.f32 %v1036, %v1046
    %v1049 = vpack.c.bf16 %v1048, %v1048
    %v1050 = vld [vmem:[#allocation14] sm:$0xff]
    %v1051 = vld [vmem:[#allocation14 + $0x8] sm:$0xff]
    %v1052 = vld [vmem:[#allocation14 + $0x10] sm:$0xff]
    %v1053 = vld [vmem:[#allocation14 + $0x18] sm:$0xff]
    %v1054 = vld [vmem:[#allocation14 + $0x20] sm:$0xff]
    %v1055 = vld [vmem:[#allocation14 + $0x28] sm:$0xff]
    %v1056 = vld [vmem:[#allocation14 + $0x30] sm:$0xff]
    %v1057 = vld [vmem:[#allocation14 + $0x38] sm:$0xff]
    %v1058 = vld [vmem:[#allocation14 + $0x40] sm:$0xff]
    %v1059 = vld [vmem:[#allocation14 + $0x48] sm:$0xff]
    %v1060 = vld [vmem:[#allocation14 + $0x50] sm:$0xff]
    %v1061 = vld [vmem:[#allocation14 + $0x58] sm:$0xff]
    %v1062 = vld [vmem:[#allocation14 + $0x60] sm:$0xff]
    %v1063 = vld [vmem:[#allocation14 + $0x68] sm:$0xff]
    %v1064 = vld [vmem:[#allocation14 + $0x70] sm:$0xff]
    %v1065 = vld [vmem:[#allocation14 + $0x78] sm:$0xff]
    %v1066 = vld [vmem:[#allocation14 + $0x80] sm:$0xff]
    %v1067 = vld [vmem:[#allocation14 + $0x88] sm:$0xff]
    %v1068 = vld [vmem:[#allocation14 + $0x90] sm:$0xff]
    %v1069 = vld [vmem:[#allocation14 + $0x98] sm:$0xff]
    %v1070 = vld [vmem:[#allocation14 + $0xa0] sm:$0xff]
    %v1071 = vld [vmem:[#allocation14 + $0xa8] sm:$0xff]
    %v1072 = vld [vmem:[#allocation14 + $0xb0] sm:$0xff]
    %v1073 = vld [vmem:[#allocation14 + $0xb8] sm:$0xff]
    %v1074 = vld [vmem:[#allocation14 + $0xc0] sm:$0xff]
    %v1075 = vld [vmem:[#allocation14 + $0xc8] sm:$0xff]
    %v1076 = vld [vmem:[#allocation14 + $0xd0] sm:$0xff]
    %v1077 = vld [vmem:[#allocation14 + $0xd8] sm:$0xff]
    %v1078 = vld [vmem:[#allocation14 + $0xe0] sm:$0xff]
    %v1079 = vld [vmem:[#allocation14 + $0xe8] sm:$0xff]
    %v1080 = vld [vmem:[#allocation14 + $0xf0] sm:$0xff]
    %v1081 = vld [vmem:[#allocation14 + $0xf8] sm:$0xff]
    %v1082 = vld [vmem:[#allocation16] sm:$0xff]
    %v1083 = vld [vmem:[#allocation16 + $0x8] sm:$0xff]
    %v1084 = vld [vmem:[#allocation16 + $0x10] sm:$0xff]
    %v1085 = vld [vmem:[#allocation16 + $0x18] sm:$0xff]
    %v1086 = vld [vmem:[#allocation16 + $0x20] sm:$0xff]
    %v1087 = vld [vmem:[#allocation16 + $0x28] sm:$0xff]
    %v1088 = vld [vmem:[#allocation16 + $0x30] sm:$0xff]
    %v1089 = vld [vmem:[#allocation16 + $0x38] sm:$0xff]
    %v1090 = vld [vmem:[#allocation16 + $0x40] sm:$0xff]
    %v1091 = vld [vmem:[#allocation16 + $0x48] sm:$0xff]
    %v1092 = vld [vmem:[#allocation16 + $0x50] sm:$0xff]
    %v1093 = vld [vmem:[#allocation16 + $0x58] sm:$0xff]
    %v1094 = vld [vmem:[#allocation16 + $0x60] sm:$0xff]
    %v1095 = vld [vmem:[#allocation16 + $0x68] sm:$0xff]
    %v1096 = vld [vmem:[#allocation16 + $0x70] sm:$0xff]
    %v1097 = vld [vmem:[#allocation16 + $0x78] sm:$0xff]
    %v1098 = vld [vmem:[#allocation16 + $0x80] sm:$0xff]
    %v1099 = vld [vmem:[#allocation16 + $0x88] sm:$0xff]
    %v1100 = vld [vmem:[#allocation16 + $0x90] sm:$0xff]
    %v1101 = vld [vmem:[#allocation16 + $0x98] sm:$0xff]
    %v1102 = vld [vmem:[#allocation16 + $0xa0] sm:$0xff]
    %v1103 = vld [vmem:[#allocation16 + $0xa8] sm:$0xff]
    %v1104 = vld [vmem:[#allocation16 + $0xb0] sm:$0xff]
    %v1105 = vld [vmem:[#allocation16 + $0xb8] sm:$0xff]
    %v1106 = vld [vmem:[#allocation16 + $0xc0] sm:$0xff]
    %v1107 = vld [vmem:[#allocation16 + $0xc8] sm:$0xff]
    %v1108 = vld [vmem:[#allocation16 + $0xd0] sm:$0xff]
    %v1109 = vld [vmem:[#allocation16 + $0xd8] sm:$0xff]
    %v1110 = vld [vmem:[#allocation16 + $0xe0] sm:$0xff]
    %v1111 = vld [vmem:[#allocation16 + $0xe8] sm:$0xff]
    %v1112 = vld [vmem:[#allocation16 + $0xf0] sm:$0xff]
    %v1113 = vld [vmem:[#allocation16 + $0xf8] sm:$0xff]
    %v1146 = vunpack.c.l.b16 %v1082
    %v1147 = vunpack.c.h.b16 %v1082
    %v1148 = vunpack.c.l.b16 %v1083
    %v1149 = vunpack.c.h.b16 %v1083
    %v1150 = vunpack.c.l.b16 %v1084
    %v1151 = vunpack.c.h.b16 %v1084
    %v1152 = vunpack.c.l.b16 %v1085
    %v1153 = vunpack.c.h.b16 %v1085
    %v1154 = vunpack.c.l.b16 %v1086
    %v1155 = vunpack.c.h.b16 %v1086
    %v1156 = vunpack.c.l.b16 %v1087
    %v1157 = vunpack.c.h.b16 %v1087
    %v1158 = vunpack.c.l.b16 %v1088
    %v1159 = vunpack.c.h.b16 %v1088
    %v1160 = vunpack.c.l.b16 %v1089
    %v1161 = vunpack.c.h.b16 %v1089
    %v1162 = vunpack.c.l.b16 %v1090
    %v1163 = vunpack.c.h.b16 %v1090
    %v1164 = vunpack.c.l.b16 %v1091
    %v1165 = vunpack.c.h.b16 %v1091
    %v1166 = vunpack.c.l.b16 %v1092
    %v1167 = vunpack.c.h.b16 %v1092
    %v1168 = vunpack.c.l.b16 %v1093
    %v1169 = vunpack.c.h.b16 %v1093
    %v1170 = vunpack.c.l.b16 %v1094
    %v1171 = vunpack.c.h.b16 %v1094
    %v1172 = vunpack.c.l.b16 %v1095
    %v1173 = vunpack.c.h.b16 %v1095
    %v1174 = vunpack.c.l.b16 %v1096
    %v1175 = vunpack.c.h.b16 %v1096
    %v1176 = vunpack.c.l.b16 %v1097
    %v1177 = vunpack.c.h.b16 %v1097
    %v1178 = vunpack.c.l.b16 %v1098
    %v1179 = vunpack.c.h.b16 %v1098
    %v1180 = vunpack.c.l.b16 %v1099
    %v1181 = vunpack.c.h.b16 %v1099
    %v1182 = vunpack.c.l.b16 %v1100
    %v1183 = vunpack.c.h.b16 %v1100
    %v1184 = vunpack.c.l.b16 %v1101
    %v1185 = vunpack.c.h.b16 %v1101
    %v1186 = vunpack.c.l.b16 %v1102
    %v1187 = vunpack.c.h.b16 %v1102
    %v1188 = vunpack.c.l.b16 %v1103
    %v1189 = vunpack.c.h.b16 %v1103
    %v1190 = vunpack.c.l.b16 %v1104
    %v1191 = vunpack.c.h.b16 %v1104
    %v1192 = vunpack.c.l.b16 %v1105
    %v1193 = vunpack.c.h.b16 %v1105
    %v1194 = vunpack.c.l.b16 %v1106
    %v1195 = vunpack.c.h.b16 %v1106
    %v1196 = vunpack.c.l.b16 %v1107
    %v1197 = vunpack.c.h.b16 %v1107
    %v1198 = vunpack.c.l.b16 %v1108
    %v1199 = vunpack.c.h.b16 %v1108
    %v1200 = vunpack.c.l.b16 %v1109
    %v1201 = vunpack.c.h.b16 %v1109
    %v1202 = vunpack.c.l.b16 %v1110
    %v1203 = vunpack.c.h.b16 %v1110
    %v1204 = vunpack.c.l.b16 %v1111
    %v1205 = vunpack.c.h.b16 %v1111
    %v1206 = vunpack.c.l.b16 %v1112
    %v1207 = vunpack.c.h.b16 %v1112
    %v1208 = vunpack.c.l.b16 %v1113
    %v1209 = vunpack.c.h.b16 %v1113
    %v1210 = vpack.c.b16 %v1150, %v1146
    %v1211 = vpack.c.b16 %v1151, %v1147
    %v1212 = vpack.c.b16 %v1152, %v1148
    %v1213 = vpack.c.b16 %v1153, %v1149
    %v1214 = vpack.c.b16 %v1158, %v1154
    %v1215 = vpack.c.b16 %v1159, %v1155
    %v1216 = vpack.c.b16 %v1160, %v1156
    %v1217 = vpack.c.b16 %v1161, %v1157
    %v1218 = vpack.c.b16 %v1166, %v1162
    %v1219 = vpack.c.b16 %v1167, %v1163
    %v1220 = vpack.c.b16 %v1168, %v1164
    %v1221 = vpack.c.b16 %v1169, %v1165
    %v1222 = vpack.c.b16 %v1174, %v1170
    %v1223 = vpack.c.b16 %v1175, %v1171
    %v1224 = vpack.c.b16 %v1176, %v1172
    %v1225 = vpack.c.b16 %v1177, %v1173
    %v1226 = vpack.c.b16 %v1182, %v1178
    %v1227 = vpack.c.b16 %v1183, %v1179
    %v1228 = vpack.c.b16 %v1184, %v1180
    %v1229 = vpack.c.b16 %v1185, %v1181
    %v1230 = vpack.c.b16 %v1190, %v1186
    %v1231 = vpack.c.b16 %v1191, %v1187
    %v1232 = vpack.c.b16 %v1192, %v1188
    %v1233 = vpack.c.b16 %v1193, %v1189
    %v1234 = vpack.c.b16 %v1198, %v1194
    %v1235 = vpack.c.b16 %v1199, %v1195
    %v1236 = vpack.c.b16 %v1200, %v1196
    %v1237 = vpack.c.b16 %v1201, %v1197
    %v1238 = vpack.c.b16 %v1206, %v1202
    %v1239 = vpack.c.b16 %v1207, %v1203
    %v1240 = vpack.c.b16 %v1208, %v1204
    %v1241 = vpack.c.b16 %v1209, %v1205
    %1274 = vmatprep.subr.bf16.mxu0 %v1211
    %1275 = vmatpush1.bf16.msra.mxu0 %v1210
    %1276 = vmatprep.subr.bf16.mxu0 %v1215
    %1277 = vmatpush1.bf16.msra.mxu0 %v1214
    %1278 = vmatprep.subr.bf16.mxu0 %v1219
    %1279 = vmatpush1.bf16.msra.mxu0 %v1218
    %1280 = vmatprep.subr.bf16.mxu0 %v1223
    %1281 = vmatpush1.bf16.msra.mxu0 %v1222
    %1282 = vmatprep.subr.bf16.mxu0 %v1227
    %1283 = vmatpush1.bf16.msra.mxu0 %v1226
    %1284 = vmatprep.subr.bf16.mxu0 %v1231
    %1285 = vmatpush1.bf16.msra.mxu0 %v1230
    %1286 = vmatprep.subr.bf16.mxu0 %v1235
    %1287 = vmatpush1.bf16.msra.mxu0 %v1234
    %1288 = vmatprep.subr.bf16.mxu0 %v1239
    %1289 = vmatpush1.bf16.msra.mxu0 %v1238
    %1290 = vmatprep.subr.bf16.mxu0 0
    %1291 = vmatpush1.bf16.msra.mxu0 0
    %1292 = vmatprep.subr.bf16.mxu0 0
    %1293 = vmatpush1.bf16.msra.mxu0 0
    %1294 = vmatprep.subr.bf16.mxu0 0
    %1295 = vmatpush1.bf16.msra.mxu0 0
    %1296 = vmatprep.subr.bf16.mxu0 0
    %1297 = vmatpush1.bf16.msra.mxu0 0
    %1298 = vmatprep.subr.bf16.mxu0 0
    %1299 = vmatpush1.bf16.msra.mxu0 0
    %1300 = vmatprep.subr.bf16.mxu0 0
    %1301 = vmatpush1.bf16.msra.mxu0 0
    %1302 = vmatprep.subr.bf16.mxu0 0
    %1303 = vmatpush1.bf16.msra.mxu0 0
    %1304 = vmatprep.subr.bf16.mxu0 0
    %1305 = vmatpush1.bf16.msra.mxu0 0
    %1306 = vmatprep.mubr.bf16.mxu0 0
    %1307 = vmatmul.mubr.bf16.gmra.mrb[0].mxu0 %v196
    %v1308 = vpop.f32.mrb[0].mxu0
    %v1309 = vadd.f32 0.0, %v1308
    %v1310 = vpop.f32.mrb[0].mxu0
    %v1311 = vadd.f32 0.0, %v1310
    %v1312 = vpop.f32.mrb[0].mxu0
    %v1313 = vpop.f32.mrb[0].mxu0
    %1314 = vdwg.mxu0
    %1315 = vmatprep.subr.bf16.mxu0 %v1213
    %1316 = vmatpush1.bf16.msra.mxu0 %v1212
    %1317 = vmatprep.subr.bf16.mxu0 %v1217
    %1318 = vmatpush1.bf16.msra.mxu0 %v1216
    %1319 = vmatprep.subr.bf16.mxu0 %v1221
    %1320 = vmatpush1.bf16.msra.mxu0 %v1220
    %1321 = vmatprep.subr.bf16.mxu0 %v1225
    %1322 = vmatpush1.bf16.msra.mxu0 %v1224
    %1323 = vmatprep.subr.bf16.mxu0 %v1229
    %1324 = vmatpush1.bf16.msra.mxu0 %v1228
    %1325 = vmatprep.subr.bf16.mxu0 %v1233
    %1326 = vmatpush1.bf16.msra.mxu0 %v1232
    %1327 = vmatprep.subr.bf16.mxu0 %v1237
    %1328 = vmatpush1.bf16.msra.mxu0 %v1236
    %1329 = vmatprep.subr.bf16.mxu0 %v1241
    %1330 = vmatpush1.bf16.msra.mxu0 %v1240
    %1331 = vmatprep.subr.bf16.mxu0 0
    %1332 = vmatpush1.bf16.msra.mxu0 0
    %1333 = vmatprep.subr.bf16.mxu0 0
    %1334 = vmatpush1.bf16.msra.mxu0 0
    %1335 = vmatprep.subr.bf16.mxu0 0
    %1336 = vmatpush1.bf16.msra.mxu0 0
    %1337 = vmatprep.subr.bf16.mxu0 0
    %1338 = vmatpush1.bf16.msra.mxu0 0
    %1339 = vmatprep.subr.bf16.mxu0 0
    %1340 = vmatpush1.bf16.msra.mxu0 0
    %1341 = vmatprep.subr.bf16.mxu0 0
    %1342 = vmatpush1.bf16.msra.mxu0 0
    %1343 = vmatprep.subr.bf16.mxu0 0
    %1344 = vmatpush1.bf16.msra.mxu0 0
    %1345 = vmatprep.subr.bf16.mxu0 0
    %1346 = vmatpush1.bf16.msra.mxu0 0
    %1347 = vmatprep.mubr.bf16.mxu0 0
    %1348 = vmatmul.mubr.bf16.gmra.mrb[0].mxu0 %v196
    %v1349 = vpop.f32.mrb[0].mxu0
    %v1350 = vadd.f32 0.0, %v1349
    %v1351 = vpop.f32.mrb[0].mxu0
    %v1352 = vadd.f32 0.0, %v1351
    %v1353 = vpop.f32.mrb[0].mxu0
    %v1354 = vpop.f32.mrb[0].mxu0
    %1355 = vdwg.mxu0
    %v1388 = vunpack.c.l.b16 %v1050
    %v1389 = vunpack.c.h.b16 %v1050
    %v1390 = vunpack.c.l.b16 %v1051
    %v1391 = vunpack.c.h.b16 %v1051
    %v1392 = vunpack.c.l.b16 %v1052
    %v1393 = vunpack.c.h.b16 %v1052
    %v1394 = vunpack.c.l.b16 %v1053
    %v1395 = vunpack.c.h.b16 %v1053
    %v1396 = vunpack.c.l.b16 %v1054
    %v1397 = vunpack.c.h.b16 %v1054
    %v1398 = vunpack.c.l.b16 %v1055
    %v1399 = vunpack.c.h.b16 %v1055
    %v1400 = vunpack.c.l.b16 %v1056
    %v1401 = vunpack.c.h.b16 %v1056
    %v1402 = vunpack.c.l.b16 %v1057
    %v1403 = vunpack.c.h.b16 %v1057
    %v1404 = vunpack.c.l.b16 %v1058
    %v1405 = vunpack.c.h.b16 %v1058
    %v1406 = vunpack.c.l.b16 %v1059
    %v1407 = vunpack.c.h.b16 %v1059
    %v1408 = vunpack.c.l.b16 %v1060
    %v1409 = vunpack.c.h.b16 %v1060
    %v1410 = vunpack.c.l.b16 %v1061
    %v1411 = vunpack.c.h.b16 %v1061
    %v1412 = vunpack.c.l.b16 %v1062
    %v1413 = vunpack.c.h.b16 %v1062
    %v1414 = vunpack.c.l.b16 %v1063
    %v1415 = vunpack.c.h.b16 %v1063
    %v1416 = vunpack.c.l.b16 %v1064
    %v1417 = vunpack.c.h.b16 %v1064
    %v1418 = vunpack.c.l.b16 %v1065
    %v1419 = vunpack.c.h.b16 %v1065
    %v1420 = vunpack.c.l.b16 %v1066
    %v1421 = vunpack.c.h.b16 %v1066
    %v1422 = vunpack.c.l.b16 %v1067
    %v1423 = vunpack.c.h.b16 %v1067
    %v1424 = vunpack.c.l.b16 %v1068
    %v1425 = vunpack.c.h.b16 %v1068
    %v1426 = vunpack.c.l.b16 %v1069
    %v1427 = vunpack.c.h.b16 %v1069
    %v1428 = vunpack.c.l.b16 %v1070
    %v1429 = vunpack.c.h.b16 %v1070
    %v1430 = vunpack.c.l.b16 %v1071
    %v1431 = vunpack.c.h.b16 %v1071
    %v1432 = vunpack.c.l.b16 %v1072
    %v1433 = vunpack.c.h.b16 %v1072
    %v1434 = vunpack.c.l.b16 %v1073
    %v1435 = vunpack.c.h.b16 %v1073
    %v1436 = vunpack.c.l.b16 %v1074
    %v1437 = vunpack.c.h.b16 %v1074
    %v1438 = vunpack.c.l.b16 %v1075
    %v1439 = vunpack.c.h.b16 %v1075
    %v1440 = vunpack.c.l.b16 %v1076
    %v1441 = vunpack.c.h.b16 %v1076
    %v1442 = vunpack.c.l.b16 %v1077
    %v1443 = vunpack.c.h.b16 %v1077
    %v1444 = vunpack.c.l.b16 %v1078
    %v1445 = vunpack.c.h.b16 %v1078
    %v1446 = vunpack.c.l.b16 %v1079
    %v1447 = vunpack.c.h.b16 %v1079
    %v1448 = vunpack.c.l.b16 %v1080
    %v1449 = vunpack.c.h.b16 %v1080
    %v1450 = vunpack.c.l.b16 %v1081
    %v1451 = vunpack.c.h.b16 %v1081
    %v1452 = vpack.c.b16 %v1392, %v1388
    %v1453 = vpack.c.b16 %v1393, %v1389
    %v1454 = vpack.c.b16 %v1394, %v1390
    %v1455 = vpack.c.b16 %v1395, %v1391
    %v1456 = vpack.c.b16 %v1400, %v1396
    %v1457 = vpack.c.b16 %v1401, %v1397
    %v1458 = vpack.c.b16 %v1402, %v1398
    %v1459 = vpack.c.b16 %v1403, %v1399
    %v1460 = vpack.c.b16 %v1408, %v1404
    %v1461 = vpack.c.b16 %v1409, %v1405
    %v1462 = vpack.c.b16 %v1410, %v1406
    %v1463 = vpack.c.b16 %v1411, %v1407
    %v1464 = vpack.c.b16 %v1416, %v1412
    %v1465 = vpack.c.b16 %v1417, %v1413
    %v1466 = vpack.c.b16 %v1418, %v1414
    %v1467 = vpack.c.b16 %v1419, %v1415
    %v1468 = vpack.c.b16 %v1424, %v1420
    %v1469 = vpack.c.b16 %v1425, %v1421
    %v1470 = vpack.c.b16 %v1426, %v1422
    %v1471 = vpack.c.b16 %v1427, %v1423
    %v1472 = vpack.c.b16 %v1432, %v1428
    %v1473 = vpack.c.b16 %v1433, %v1429
    %v1474 = vpack.c.b16 %v1434, %v1430
    %v1475 = vpack.c.b16 %v1435, %v1431
    %v1476 = vpack.c.b16 %v1440, %v1436
    %v1477 = vpack.c.b16 %v1441, %v1437
    %v1478 = vpack.c.b16 %v1442, %v1438
    %v1479 = vpack.c.b16 %v1443, %v1439
    %v1480 = vpack.c.b16 %v1448, %v1444
    %v1481 = vpack.c.b16 %v1449, %v1445
    %v1482 = vpack.c.b16 %v1450, %v1446
    %v1483 = vpack.c.b16 %v1451, %v1447
    %1516 = vmatprep.subr.bf16.mxu0 %v1453
    %1517 = vmatpush1.bf16.msra.mxu0 %v1452
    %1518 = vmatprep.subr.bf16.mxu0 %v1457
    %1519 = vmatpush1.bf16.msra.mxu0 %v1456
    %1520 = vmatprep.subr.bf16.mxu0 %v1461
    %1521 = vmatpush1.bf16.msra.mxu0 %v1460
    %1522 = vmatprep.subr.bf16.mxu0 %v1465
    %1523 = vmatpush1.bf16.msra.mxu0 %v1464
    %1524 = vmatprep.subr.bf16.mxu0 %v1469
    %1525 = vmatpush1.bf16.msra.mxu0 %v1468
    %1526 = vmatprep.subr.bf16.mxu0 %v1473
    %1527 = vmatpush1.bf16.msra.mxu0 %v1472
    %1528 = vmatprep.subr.bf16.mxu0 %v1477
    %1529 = vmatpush1.bf16.msra.mxu0 %v1476
    %1530 = vmatprep.subr.bf16.mxu0 %v1481
    %1531 = vmatpush1.bf16.msra.mxu0 %v1480
    %1532 = vmatprep.subr.bf16.mxu0 0
    %1533 = vmatpush1.bf16.msra.mxu0 0
    %1534 = vmatprep.subr.bf16.mxu0 0
    %1535 = vmatpush1.bf16.msra.mxu0 0
    %1536 = vmatprep.subr.bf16.mxu0 0
    %1537 = vmatpush1.bf16.msra.mxu0 0
    %1538 = vmatprep.subr.bf16.mxu0 0
    %1539 = vmatpush1.bf16.msra.mxu0 0
    %1540 = vmatprep.subr.bf16.mxu0 0
    %1541 = vmatpush1.bf16.msra.mxu0 0
    %1542 = vmatprep.subr.bf16.mxu0 0
    %1543 = vmatpush1.bf16.msra.mxu0 0
    %1544 = vmatprep.subr.bf16.mxu0 0
    %1545 = vmatpush1.bf16.msra.mxu0 0
    %1546 = vmatprep.subr.bf16.mxu0 0
    %1547 = vmatpush1.bf16.msra.mxu0 0
    %1548 = vmatprep.mubr.bf16.mxu0 0
    %1549 = vmatmul.mubr.bf16.gmra.mrb[0].mxu0 %v1049
    %v1550 = vpop.f32.mrb[0].mxu0
    %v1551 = vadd.f32 %v1309, %v1550
    %v1552 = vpop.f32.mrb[0].mxu0
    %v1553 = vadd.f32 %v1311, %v1552
    %v1554 = vpop.f32.mrb[0].mxu0
    %v1555 = vpop.f32.mrb[0].mxu0
    %1556 = vdwg.mxu0
    %1557 = vmatprep.subr.bf16.mxu0 %v1455
    %1558 = vmatpush1.bf16.msra.mxu0 %v1454
    %1559 = vmatprep.subr.bf16.mxu0 %v1459
    %1560 = vmatpush1.bf16.msra.mxu0 %v1458
    %1561 = vmatprep.subr.bf16.mxu0 %v1463
    %1562 = vmatpush1.bf16.msra.mxu0 %v1462
    %1563 = vmatprep.subr.bf16.mxu0 %v1467
    %1564 = vmatpush1.bf16.msra.mxu0 %v1466
    %1565 = vmatprep.subr.bf16.mxu0 %v1471
    %1566 = vmatpush1.bf16.msra.mxu0 %v1470
    %1567 = vmatprep.subr.bf16.mxu0 %v1475
    %1568 = vmatpush1.bf16.msra.mxu0 %v1474
    %1569 = vmatprep.subr.bf16.mxu0 %v1479
    %1570 = vmatpush1.bf16.msra.mxu0 %v1478
    %1571 = vmatprep.subr.bf16.mxu0 %v1483
    %1572 = vmatpush1.bf16.msra.mxu0 %v1482
    %1573 = vmatprep.subr.bf16.mxu0 0
    %1574 = vmatpush1.bf16.msra.mxu0 0
    %1575 = vmatprep.subr.bf16.mxu0 0
    %1576 = vmatpush1.bf16.msra.mxu0 0
    %1577 = vmatprep.subr.bf16.mxu0 0
    %1578 = vmatpush1.bf16.msra.mxu0 0
    %1579 = vmatprep.subr.bf16.mxu0 0
    %1580 = vmatpush1.bf16.msra.mxu0 0
    %1581 = vmatprep.subr.bf16.mxu0 0
    %1582 = vmatpush1.bf16.msra.mxu0 0
    %1583 = vmatprep.subr.bf16.mxu0 0
    %1584 = vmatpush1.bf16.msra.mxu0 0
    %1585 = vmatprep.subr.bf16.mxu0 0
    %1586 = vmatpush1.bf16.msra.mxu0 0
    %1587 = vmatprep.subr.bf16.mxu0 0
    %1588 = vmatpush1.bf16.msra.mxu0 0
    %1589 = vmatprep.mubr.bf16.mxu0 0
    %1590 = vmatmul.mubr.bf16.gmra.mrb[0].mxu0 %v1049
    %v1591 = vpop.f32.mrb[0].mxu0
    %v1592 = vadd.f32 %v1350, %v1591
    %v1593 = vpop.f32.mrb[0].mxu0
    %v1594 = vadd.f32 %v1352, %v1593
    %v1595 = vpop.f32.mrb[0].mxu0
    %v1596 = vpop.f32.mrb[0].mxu0
    %1597 = vdwg.mxu0
    %v1598 = vld [vmem:[%s12] sm:$0xf]
    %v1600 = vlaneseq
    %v1601 = vshrl.u32 %v1600, 7
    %v1602 = vsub.s32 0, %v1601
    %v1603 = vrot.slane %v1598, %v1602
    %v1604 = vlaneseq
    %v1605 = vshrl.u32 %v1604, 7
    %v1606 = vsub.s32 1, %v1605
    %v1607 = vrot.slane %v1598, %v1606
    %v1608 = vlaneseq
    %v1609 = vshrl.u32 %v1608, 7
    %v1610 = vsub.s32 2, %v1609
    %v1611 = vrot.slane %v1598, %v1610
    %v1612 = vlaneseq
    %v1613 = vshrl.u32 %v1612, 7
    %v1614 = vsub.s32 3, %v1613
    %v1615 = vrot.slane %v1598, %v1614
    %v1620 = vadd.f32 %v1551, %v1603
    %v1621 = vadd.f32 %v1553, %v1607
    %v1622 = vadd.f32 %v1592, %v1611
    %v1623 = vadd.f32 %v1594, %v1615
    %v1624 = vmul.f32 %v1620, 0.5
    %v1625 = vtanh.pop %v1624
    %v1626 = vmul.f32 %v1625, 0.5
    %v1627 = vadd.f32 %v1626, 0.5
    %v1628 = vmul.f32 %v1621, 0.5
    %v1629 = vtanh.pop %v1628
    %v1630 = vmul.f32 %v1629, 0.5
    %v1631 = vadd.f32 %v1630, 0.5
    %v1632 = vtanh.pop %v1622
    %v1633 = vmul.f32 %v1623, 0.5
    %v1634 = vtanh.pop %v1633
    %v1635 = vmul.f32 %v1634, 0.5
    %v1636 = vadd.f32 %v1635, 0.5
    %v1637 = vmul.f32 %v1631, %v197
    %v1638 = vmul.f32 %v1627, %v1632
    %v1639 = vadd.f32 %v1637, %v1638
    %v1640 = vtanh.pop %v1639
    %v1641 = vmul.f32 %v1636, %v1640
    %v1642 = vpack.c.bf16 %v1641, %v1641
    %v1643 = vld [vmem:[#allocation17] sm:$0xf]
    %v1644 = vld [vmem:[#allocation17 + $0x4] sm:$0xf]
    %v1645 = vld [vmem:[#allocation17 + $0x8] sm:$0xf]
    %v1646 = vld [vmem:[#allocation17 + $0xc] sm:$0xf]
    %v1647 = vld [vmem:[#allocation17 + $0x10] sm:$0xf]
    %v1648 = vld [vmem:[#allocation17 + $0x14] sm:$0xf]
    %v1649 = vld [vmem:[#allocation17 + $0x18] sm:$0xf]
    %v1650 = vld [vmem:[#allocation17 + $0x1c] sm:$0xf]
    %v1651 = vld [vmem:[#allocation17 + $0x20] sm:$0xf]
    %v1652 = vld [vmem:[#allocation17 + $0x24] sm:$0xf]
    %v1653 = vld [vmem:[#allocation17 + $0x28] sm:$0xf]
    %v1654 = vld [vmem:[#allocation17 + $0x2c] sm:$0xf]
    %v1655 = vld [vmem:[#allocation17 + $0x30] sm:$0xf]
    %v1656 = vld [vmem:[#allocation17 + $0x34] sm:$0xf]
    %v1657 = vld [vmem:[#allocation17 + $0x38] sm:$0xf]
    %v1658 = vld [vmem:[#allocation17 + $0x3c] sm:$0xf]
    %v1659 = vld [vmem:[%s14] sm:$0x1]
    %v1661 = vlaneseq
    %v1662 = vshrl.u32 %v1661, 7
    %v1663 = vsub.s32 0, %v1662
    %v1664 = vrot.slane %v1659, %v1663
    %v1682 = vunpack.c.l.b16 %v1643
    %v1683 = vunpack.c.l.b16 %v1644
    %v1684 = vunpack.c.l.b16 %v1645
    %v1685 = vunpack.c.l.b16 %v1646
    %v1686 = vunpack.c.l.b16 %v1647
    %v1687 = vunpack.c.l.b16 %v1648
    %v1688 = vunpack.c.l.b16 %v1649
    %v1689 = vunpack.c.l.b16 %v1650
    %v1690 = vunpack.c.l.b16 %v1651
    %v1691 = vunpack.c.l.b16 %v1652
    %v1692 = vunpack.c.l.b16 %v1653
    %v1693 = vunpack.c.l.b16 %v1654
    %v1694 = vunpack.c.l.b16 %v1655
    %v1695 = vunpack.c.l.b16 %v1656
    %v1696 = vunpack.c.l.b16 %v1657
    %v1697 = vunpack.c.l.b16 %v1658
    %v1698 = vpack.c.b16 %v1683, %v1682
    %v1699 = vpack.c.b16 %v1685, %v1684
    %v1700 = vpack.c.b16 %v1687, %v1686
    %v1701 = vpack.c.b16 %v1689, %v1688
    %v1702 = vpack.c.b16 %v1691, %v1690
    %v1703 = vpack.c.b16 %v1693, %v1692
    %v1704 = vpack.c.b16 %v1695, %v1694
    %v1705 = vpack.c.b16 %v1697, %v1696
    %1714 = vmatprep.subr.bf16.mxu0 0
    %1715 = vmatpush1.bf16.msra.mxu0 %v1698
    %1716 = vmatprep.subr.bf16.mxu0 0
    %1717 = vmatpush1.bf16.msra.mxu0 %v1699
    %1718 = vmatprep.subr.bf16.mxu0 0
    %1719 = vmatpush1.bf16.msra.mxu0 %v1700
    %1720 = vmatprep.subr.bf16.mxu0 0
    %1721 = vmatpush1.bf16.msra.mxu0 %v1701
    %1722 = vmatprep.subr.bf16.mxu0 0
    %1723 = vmatpush1.bf16.msra.mxu0 %v1702
    %1724 = vmatprep.subr.bf16.mxu0 0
    %1725 = vmatpush1.bf16.msra.mxu0 %v1703
    %1726 = vmatprep.subr.bf16.mxu0 0
    %1727 = vmatpush1.bf16.msra.mxu0 %v1704
    %1728 = vmatprep.subr.bf16.mxu0 0
    %1729 = vmatpush1.bf16.msra.mxu0 %v1705
    %1730 = vmatprep.subr.bf16.mxu0 0
    %1731 = vmatpush1.bf16.msra.mxu0 0
    %1732 = vmatprep.subr.bf16.mxu0 0
    %1733 = vmatpush1.bf16.msra.mxu0 0
    %1734 = vmatprep.subr.bf16.mxu0 0
    %1735 = vmatpush1.bf16.msra.mxu0 0
    %1736 = vmatprep.subr.bf16.mxu0 0
    %1737 = vmatpush1.bf16.msra.mxu0 0
    %1738 = vmatprep.subr.bf16.mxu0 0
    %1739 = vmatpush1.bf16.msra.mxu0 0
    %1740 = vmatprep.subr.bf16.mxu0 0
    %1741 = vmatpush1.bf16.msra.mxu0 0
    %1742 = vmatprep.subr.bf16.mxu0 0
    %1743 = vmatpush1.bf16.msra.mxu0 0
    %1744 = vmatprep.subr.bf16.mxu0 0
    %1745 = vmatpush1.bf16.msra.mxu0 0
    %1746 = vmatprep.mubr.bf16.mxu0 0
    %1747 = vmatmul.mubr.bf16.gmra.mrb[0].mxu0 %v1642
    %v1748 = vpop.f32.mrb[0].mxu0
    %v1749 = vadd.f32 %v1664, %v1748
    %v1750 = vpop.f32.mrb[0].mxu0
    %v1751 = vpop.f32.mrb[0].mxu0
    %v1752 = vpop.f32.mrb[0].mxu0
    %1753 = vdwg.mxu0
    %1754 = vst [vmem:[#allocation19] sm:$0xff] %v1749
    %1755 = vst [vmem:[#allocation20] sm:$0xff] %v1641
    %1756 = vst [vmem:[#allocation22] sm:$0xff] %v1639
    // Predicated region
    $region102: #{tpu_custom_call.1} parent=1 // pred_check
      _
    $region103: #{tpu_custom_call.1} parent=1 // pred_check_branch
      %1758 = sbr.rel (0) target = $region105
    $region104: #{tpu_custom_call.1} parent=1 // pred_region
      %s1760 = ssub.s32 128, 128
      %1761 = vsyncadd [#allocation4], %s1760
      %s1763 = sshll.u32 [#allocation19], 4
      %s1764 = int_to_ptr.vmem [resolvable:$true] %s1763
      %1766 = dma.vmem_to_hbm [thread:$0]  %s1764, 128, %s15, [#allocation4]
    $region105: #{tpu_custom_call.1} parent=1 // pred_fallthru
      _
    // Predicated region
    $region106: #{tpu_custom_call.1} parent=1 // pred_check
      _
    $region107: #{tpu_custom_call.1} parent=1 // pred_check_branch
      %1768 = sbr.rel (0) target = $region109
    $region108: #{tpu_custom_call.1} parent=1 // pred_region
      %s1770 = ssub.s32 128, 128
      %1771 = vsyncadd [#allocation21], %s1770
      %s1773 = sshll.u32 [#allocation20], 4
      %s1774 = int_to_ptr.vmem [resolvable:$true] %s1773
      %1776 = dma.vmem_to_hbm [thread:$0]  %s1774, 128, %s16, [#allocation21]
    $region109: #{tpu_custom_call.1} parent=1 // pred_fallthru
      _
    // Predicated region
    $region110: #{tpu_custom_call.1} parent=1 // pred_check
      _
    $region111: #{tpu_custom_call.1} parent=1 // pred_check_branch
      %1778 = sbr.rel (0) target = $region113
    $region112: #{tpu_custom_call.1} parent=1 // pred_region
      %s1780 = ssub.s32 128, 128
      %1781 = vsyncadd [#allocation21], %s1780
      %s1783 = sshll.u32 [#allocation22], 4
      %s1784 = int_to_ptr.vmem [resolvable:$true] %s1783
      %1786 = dma.vmem_to_hbm [thread:$0]  %s1784, 128, %s17, [#allocation21]
    $region113: #{tpu_custom_call.1} parent=1 // pred_fallthru
      _
    // Predicated region
    $region114: #{tpu_custom_call.1} parent=1 // pred_check
      _
    $region115: #{tpu_custom_call.1} parent=1 // pred_check_branch
      %1788 = sbr.rel (0) target = $region117
    $region116: #{tpu_custom_call.1} parent=1 // pred_region
      %1789 = dma.done [#allocation4], 128
    $region117: #{tpu_custom_call.1} parent=1 // pred_fallthru
      _
    // Predicated region
    $region118: #{tpu_custom_call.1} parent=1 // pred_check
      _
    $region119: #{tpu_custom_call.1} parent=1 // pred_check_branch
      %1791 = sbr.rel (0) target = $region121
    $region120: #{tpu_custom_call.1} parent=1 // pred_region
      %1792 = dma.done [#allocation21], 128
    $region121: #{tpu_custom_call.1} parent=1 // pred_fallthru
      _
    // Predicated region
    $region122: #{tpu_custom_call.1} parent=1 // pred_check
      _
    $region123: #{tpu_custom_call.1} parent=1 // pred_check_branch
      %1794 = sbr.rel (0) target = $region125
    $region124: #{tpu_custom_call.1} parent=1 // pred_region
      %1795 = dma.done [#allocation21], 128
    $region125: #{tpu_custom_call.1} parent=1 // pred_fallthru
      _
    %1796 = vsyncpa [#allocation3], 1
    %1797 = vsyncpa [#allocation6], 1
    %1798 = vsyncpa [#allocation9], 1
    %1799 = vsyncpa [#allocation12], 1
    %1800 = vsyncpa [#allocation15], 1
    %1801 = vsyncpa [#allocation18], 1
    %1802 = vsyncpa [#allocation4], 1
    %1803 = vsyncpa [#allocation21], 1

</llo_original>
